<compile_context>
chip_gen: v7x
topology: tpu7x:2x2x1
jax: 0.10.0
libtpu: 0.0.40
codegen_flags: <defaults>
</compile_context>

<pallas_src>
import functools
import math

import jax
import jax.numpy as jnp
from jax.experimental import pallas as pl
from jax.experimental.pallas import tpu as pltpu

K = 7      # conv kernel size
PAD = 3    # 'same' padding


def _round_up(n, m):
  return -(-n // m) * m


def _erf(x):
  # Abramowitz & Stegun 7.1.26 rational approximation (|err| < 1.5e-7), f32.
  p = 0.3275911
  a1, a2, a3, a4, a5 = (0.254829592, -0.284496736, 1.421413741,
                        -1.453152027, 1.061405429)
  s = jnp.where(x >= 0, 1.0, -1.0)
  ax = jnp.abs(x)
  t = 1.0 / (1.0 + p * ax)
  poly = ((((a5 * t + a4) * t + a3) * t + a2) * t + a1) * t
  return s * (1.0 - poly * jnp.exp(-ax * ax))


def _gelu_exact(x):
  # PyTorch nn.GELU() default: 0.5 * x * (1 + erf(x / sqrt(2)))
  return 0.5 * x * (1.0 + _erf(x * (1.0 / math.sqrt(2.0))))


def _mol_translate_kernel(ym_ref, ys_ref, yw_ref, w1_ref, b1_ref, w2_ref,
                          b2_ref, o_scale_ref, o_weight_ref):
  # ym/ys/yw_ref : (GB, dim, T)  channels-first, time on the 128-lane axis
  # w1_ref       : (H2p, K*Cin_pad)  im2col conv1 weight, compute dtype
  # b1_ref       : (H2p, 1) f32
  # w2_ref       : (Cout, K*H2p)     im2col conv2 weight, compute dtype
  # b2_ref       : (Cout, 1) f32
  # o_scale_ref / o_weight_ref : (GB, dim, T)
  gb, dim, T = ym_ref.shape
  cdt = w1_ref.dtype                      # MXU compute dtype (bf16 or f32)
  h2 = w1_ref.shape[0]                    # padded hidden width (multiple of 8)
  cin = 3 * dim
  cin_pad = w1_ref.shape[1] // K          # 8-sublane-aligned channel block

  # ---- Conv1d #1: one im2col matmul for the whole batch group ----
  cols = []
  for b in range(gb):                     # static unroll (gb is tiny)
    # Stack the three inputs on the sublane axis; cast to compute dtype BEFORE
    # building im2col so the temporaries are narrow.
    xb = jnp.concatenate([ym_ref[b], ys_ref[b], yw_ref[b]], axis=0).astype(cdt)
    if cin_pad > cin:
      xb = jnp.concatenate([xb, jnp.zeros((cin_pad - cin, T), cdt)], axis=0)
    zx = jnp.zeros((cin_pad, PAD), cdt)
    xp = jnp.concatenate([zx, xb, zx], axis=1)                     # (cin_pad, T+6)
    cols.append(jnp.concatenate([xp[:, k:k + T] for k in range(K)], axis=0))
  x_col = cols[0] if gb == 1 else jnp.concatenate(cols, axis=1)    # (K*cin_pad, GB*T)

  acc1 = jnp.dot(w1_ref[...], x_col, preferred_element_type=jnp.float32)
  acc1 = acc1 + b1_ref[...]               # single fused bias add (lane bcast)

  # ---- GELU (exact / erf form), f32, lane-dense; cast for the next matmul ----
  h = _gelu_exact(acc1).astype(cdt)                                # (H2p, GB*T)

  # ---- Conv1d #2: one im2col matmul, per-batch zero halos on the lane axis ----
  zh = jnp.zeros((h2, PAD), cdt)
  hcols = []
  for b in range(gb):
    hb = h[:, b * T:(b + 1) * T]          # 128-aligned static lane slice
    hp = jnp.concatenate([zh, hb, zh], axis=1)                     # (H2p, T+6)
    hcols.append(jnp.concatenate([hp[:, k:k + T] for k in range(K)], axis=0))
  h_col = hcols[0] if gb == 1 else jnp.concatenate(hcols, axis=1)  # (K*H2p, GB*T)

  acc2 = jnp.dot(w2_ref[...], h_col, preferred_element_type=jnp.float32)
  acc2 = acc2 + b2_ref[...]                                        # (2*dim, GB*T)

  # ---- Two lane-dense outputs (no wrapper-side split) ----
  for b in range(gb):
    blk = acc2[:, b * T:(b + 1) * T]
    o_scale_ref[b] = blk[:dim, :].astype(o_scale_ref.dtype)
    o_weight_ref[b] = blk[dim:, :].astype(o_weight_ref.dtype)


@functools.partial(jax.jit, static_argnames=("num_groups",))
def mol_translator_apply(flat_params, y_mean, y_scale, y_weighted, *,
                         num_groups=1):
  """conv(7,'same') -> GELU -> conv(7,'same'), split into (scale, weight)."""
  w1_flat, b1_col, w2_flat, b2_col = flat_params
  B, dim, T = y_mean.shape
  if B % num_groups != 0:
    num_groups = 1
  gb = B // num_groups

  act_spec = pl.BlockSpec((gb, dim, T), lambda g: (g, 0, 0))

  def full2d(a):
    return pl.BlockSpec(a.shape, lambda g: (0, 0))

  return pl.pallas_call(
      _mol_translate_kernel,
      out_shape=(jax.ShapeDtypeStruct((B, dim, T), y_mean.dtype),
                 jax.ShapeDtypeStruct((B, dim, T), y_mean.dtype)),
      grid_spec=pltpu.PrefetchScalarGridSpec(
          num_scalar_prefetch=0,
          grid=(num_groups,),
          in_specs=[
              act_spec, act_spec, act_spec,
              full2d(w1_flat), full2d(b1_col),
              full2d(w2_flat), full2d(b2_col),
          ],
          out_specs=(act_spec, act_spec),
      ),
      compiler_params=pltpu.CompilerParams(
          # "parallel" lets v7x's two TensorCores split the grid when
          # num_groups == 2; it is a no-op on single-TC v5e/v6e.
          dimension_semantics=("parallel",),
          # Default scoped VMEM limit is plenty: resident blocks are < 1 MiB.
      ),
  )(y_mean, y_scale, y_weighted, w1_flat, b1_col, w2_flat, b2_col)


def _flatten_params(w1, b1, w2, b2, compute_dtype):
  """Precompute im2col weight layouts (done once; feedback item 9).

  w_flat[co, k*cin_pad + ci] = w[co, ci, k]; channels padded to 8 sublanes.
  """
  h2, cin, _ = w1.shape
  cout = w2.shape[0]
  cin_pad = _round_up(cin, 8)
  h2_pad = _round_up(h2, 8)

  w1t = jnp.transpose(w1, (0, 2, 1))                               # (h2, K, cin)
  w1t = jnp.pad(w1t, ((0, h2_pad - h2), (0, 0), (0, cin_pad - cin)))
  w1_flat = w1t.reshape(h2_pad, K * cin_pad).astype(compute_dtype)
  b1_col = jnp.pad(b1, (0, h2_pad - h2)).reshape(h2_pad, 1).astype(jnp.float32)

  w2t = jnp.transpose(w2, (0, 2, 1))                               # (cout, K, h2)
  w2t = jnp.pad(w2t, ((0, 0), (0, 0), (0, h2_pad - h2)))
  w2_flat = w2t.reshape(cout, K * h2_pad).astype(compute_dtype)
  b2_col = b2.reshape(cout, 1).astype(jnp.float32)
  return (w1_flat, b1_col, w2_flat, b2_col)


class MoLTranslate:
  """JAX/Pallas port of the PyTorch MoLTranslate module (NCL layout)."""

  def __init__(self, scales, dims, key):
    self.params = {}       # torch-layout params (for the reference check)
    self.flat_params = {}  # precomputed im2col weights, per compute dtype
    for scale, dim in zip(scales, dims):
      hidden_dim = dim * 3
      h2 = hidden_dim * 2
      out_dim = dim * 2
      k1, k2, k3, k4, key = jax.random.split(key, 5)
      bound1 = 1.0 / math.sqrt(hidden_dim * K)
      bound2 = 1.0 / math.sqrt(h2 * K)
      w1 = jax.random.uniform(k1, (h2, hidden_dim, K), jnp.float32, -bound1, bound1)
      b1 = jax.random.uniform(k2, (h2,), jnp.float32, -bound1, bound1)
      w2 = jax.random.uniform(k3, (out_dim, h2, K), jnp.float32, -bound2, bound2)
      b2 = jax.random.uniform(k4, (out_dim,), jnp.float32, -bound2, bound2)
      self.params[str(scale)] = (w1, b1, w2, b2)
      for cdt in (jnp.bfloat16, jnp.float32):
        self.flat_params[(str(scale), jnp.dtype(cdt).name)] = _flatten_params(
            w1, b1, w2, b2, cdt)

  def __call__(self, scale, y_mean, y_scale, y_weighted,
               compute_dtype=jnp.bfloat16, num_groups=1):
    # y_* are (B, dim, T), channels-first — identical to the PyTorch module.
    fp = self.flat_params[(str(scale), jnp.dtype(compute_dtype).name)]
    return mol_translator_apply(fp, y_mean, y_scale, y_weighted,
                                num_groups=num_groups)


# ---------------- pure-JAX reference (for correctness check) ----------------
def _conv1d_ref(x, w, b):  # x (B,Cin,T), w (Cout,Cin,K) torch layout, b (Cout,)
  out = jax.lax.conv_general_dilated(
      x, w, window_strides=(1,), padding=[(PAD, PAD)],
      dimension_numbers=("NCH", "OIH", "NCH"),
      precision=jax.lax.Precision.HIGHEST)
  return out + b[None, :, None]


def _ref_forward(params, y_mean, y_scale, y_weighted):
  w1, b1, w2, b2 = params
  x = jnp.concatenate([y_mean, y_scale, y_weighted], axis=1)
  h = jax.nn.gelu(_conv1d_ref(x, w1, b1), approximate=False)
  out = _conv1d_ref(h, w2, b2)
  a, b_ = jnp.split(out, 2, axis=1)
  return a, b_


if __name__ == "__main__":
  root = jax.random.PRNGKey(0)
  pkey, dkey = jax.random.split(root)
  scales = (4, 8)
  dims = (4, 8)
  B, T = 2, 256   # T multiple of 128 -> lane-dense compute & unmasked stores

  model = MoLTranslate(scales, dims, pkey)

  ok = True
  for scale, dim in zip(scales, dims):
    k1, k2, k3, dkey = jax.random.split(dkey, 4)
    y_mean = jax.random.normal(k1, (B, dim, T), jnp.float32)
    y_scale = jax.random.normal(k2, (B, dim, T), jnp.float32)
    y_weighted = jax.random.normal(k3, (B, dim, T), jnp.float32)

    s_ref, w_ref = _ref_forward(model.params[str(scale)],
                                y_mean, y_scale, y_weighted)

    # Default path: bf16 MXU inputs, f32 accumulation, batch folded into lanes
    # (single grid step).  bf16 rounding of activations/weights -> 2e-2 tol.
    s_bf, w_bf = model(scale, y_mean, y_scale, y_weighted)
    s_bf = jax.block_until_ready(s_bf)
    w_bf = jax.block_until_ready(w_bf)
    ok &= bool(jnp.allclose(s_bf, s_ref, rtol=2e-2, atol=2e-2))
    ok &= bool(jnp.allclose(w_bf, w_ref, rtol=2e-2, atol=2e-2))
    ok &= (s_bf.shape == (B, dim, T)) and (w_bf.shape == (B, dim, T))

    # v7x-style 2-way parallel grid (one batch element per TensorCore):
    # numerics must be identical in structure, same tolerance.
    s_b2, w_b2 = model(scale, y_mean, y_scale, y_weighted, num_groups=2)
    s_b2 = jax.block_until_ready(s_b2)
    w_b2 = jax.block_until_ready(w_b2)
    ok &= bool(jnp.allclose(s_b2, s_ref, rtol=2e-2, atol=2e-2))
    ok &= bool(jnp.allclose(w_b2, w_ref, rtol=2e-2, atol=2e-2))

    # f32 compute path: only the A&S erf approximation differs from the
    # fp32 reference.
    s_f32, w_f32 = model(scale, y_mean, y_scale, y_weighted,
                         compute_dtype=jnp.float32)
    s_f32 = jax.block_until_ready(s_f32)
    w_f32 = jax.block_until_ready(w_f32)
    ok &= bool(jnp.allclose(s_f32, s_ref, rtol=2e-3, atol=2e-3))
    ok &= bool(jnp.allclose(w_f32, w_ref, rtol=2e-3, atol=2e-3))

  if ok:
    print("KERNEL_OK")
  else:
    print("KERNEL_MISMATCH")
</pallas_src>

<mosaic_0001>
module attributes {stable_mosaic.version = 11 : i64} {
  func.func @_mol_translate_kernel(%arg0: i32, %arg1: memref<2x4x256xf32, #tpu.memory_space<vmem>>, %arg2: memref<2x4x256xf32, #tpu.memory_space<vmem>>, %arg3: memref<2x4x256xf32, #tpu.memory_space<vmem>>, %arg4: memref<24x112xbf16, #tpu.memory_space<vmem>>, %arg5: memref<24x1xf32, #tpu.memory_space<vmem>>, %arg6: memref<8x168xbf16, #tpu.memory_space<vmem>>, %arg7: memref<8x1xf32, #tpu.memory_space<vmem>>, %arg8: memref<2x4x256xf32, #tpu.memory_space<vmem>>, %arg9: memref<2x4x256xf32, #tpu.memory_space<vmem>>) attributes {dimension_semantics = [#tpu.dimension_semantics<parallel>], iteration_bounds = array<i64: 1>, scalar_prefetch = 0 : i64, scratch_operands = 0 : i64, tpu.core_type = #tpu.core_type<tc>, window_params = [{transform_indices = @transform_0, window_bounds = array<i64: 2, 4, 256>}, {transform_indices = @transform_1, window_bounds = array<i64: 2, 4, 256>}, {transform_indices = @transform_2, window_bounds = array<i64: 2, 4, 256>}, {pipeline_mode = #tpu.pipeline_mode<synchronous>, transform_indices = @transform_3, window_bounds = array<i64: 24, 112>}, {pipeline_mode = #tpu.pipeline_mode<synchronous>, transform_indices = @transform_4, window_bounds = array<i64: 24, 1>}, {pipeline_mode = #tpu.pipeline_mode<synchronous>, transform_indices = @transform_5, window_bounds = array<i64: 8, 168>}, {pipeline_mode = #tpu.pipeline_mode<synchronous>, transform_indices = @transform_6, window_bounds = array<i64: 8, 1>}, {transform_indices = @transform_7, window_bounds = array<i64: 2, 4, 256>}, {transform_indices = @transform_8, window_bounds = array<i64: 2, 4, 256>}]} {
    %c0 = arith.constant 0 : index
    %c0_0 = arith.constant 0 : index
    %c0_1 = arith.constant 0 : index
    %0 = vector.load %arg1[%c0, %c0_0, %c0_1] : memref<2x4x256xf32, #tpu.memory_space<vmem>>, vector<1x4x256xf32>
    %1 = vector.shape_cast %0 : vector<1x4x256xf32> to vector<4x256xf32>
    %c0_2 = arith.constant 0 : index
    %c0_3 = arith.constant 0 : index
    %c0_4 = arith.constant 0 : index
    %2 = vector.load %arg2[%c0_2, %c0_3, %c0_4] : memref<2x4x256xf32, #tpu.memory_space<vmem>>, vector<1x4x256xf32>
    %3 = vector.shape_cast %2 : vector<1x4x256xf32> to vector<4x256xf32>
    %c0_5 = arith.constant 0 : index
    %c0_6 = arith.constant 0 : index
    %c0_7 = arith.constant 0 : index
    %4 = vector.load %arg3[%c0_5, %c0_6, %c0_7] : memref<2x4x256xf32, #tpu.memory_space<vmem>>, vector<1x4x256xf32>
    %5 = vector.shape_cast %4 : vector<1x4x256xf32> to vector<4x256xf32>
    %6 = tpu.concatenate %1, %3, %5 in 0 : vector<4x256xf32>, vector<4x256xf32>, vector<4x256xf32> -> vector<12x256xf32>
    %7 = arith.truncf %6 : vector<12x256xf32> to vector<12x256xbf16>
    %cst = arith.constant 0.000000e+00 : bf16
    %8 = vector.broadcast %cst : bf16 to vector<4x256xbf16>
    %9 = tpu.concatenate %7, %8 in 0 : vector<12x256xbf16>, vector<4x256xbf16> -> vector<16x256xbf16>
    %cst_8 = arith.constant 0.000000e+00 : bf16
    %10 = vector.broadcast %cst_8 : bf16 to vector<16x3xbf16>
    %11 = tpu.concatenate %10, %9, %10 in 1 : vector<16x3xbf16>, vector<16x256xbf16>, vector<16x3xbf16> -> vector<16x262xbf16>
    %12 = vector.extract_strided_slice %11 {offsets = [0, 0], sizes = [16, 256], strides = [1, 1]} : vector<16x262xbf16> to vector<16x256xbf16>
    %13 = vector.extract_strided_slice %11 {offsets = [0, 1], sizes = [16, 256], strides = [1, 1]} : vector<16x262xbf16> to vector<16x256xbf16>
    %14 = vector.extract_strided_slice %11 {offsets = [0, 2], sizes = [16, 256], strides = [1, 1]} : vector<16x262xbf16> to vector<16x256xbf16>
    %15 = vector.extract_strided_slice %11 {offsets = [0, 3], sizes = [16, 256], strides = [1, 1]} : vector<16x262xbf16> to vector<16x256xbf16>
    %16 = vector.extract_strided_slice %11 {offsets = [0, 4], sizes = [16, 256], strides = [1, 1]} : vector<16x262xbf16> to vector<16x256xbf16>
    %17 = vector.extract_strided_slice %11 {offsets = [0, 5], sizes = [16, 256], strides = [1, 1]} : vector<16x262xbf16> to vector<16x256xbf16>
    %18 = vector.extract_strided_slice %11 {offsets = [0, 6], sizes = [16, 256], strides = [1, 1]} : vector<16x262xbf16> to vector<16x256xbf16>
    %19 = tpu.concatenate %12, %13, %14, %15, %16, %17, %18 in 0 : vector<16x256xbf16>, vector<16x256xbf16>, vector<16x256xbf16>, vector<16x256xbf16>, vector<16x256xbf16>, vector<16x256xbf16>, vector<16x256xbf16> -> vector<112x256xbf16>
    %c1 = arith.constant 1 : index
    %c0_9 = arith.constant 0 : index
    %c0_10 = arith.constant 0 : index
    %20 = vector.load %arg1[%c1, %c0_9, %c0_10] : memref<2x4x256xf32, #tpu.memory_space<vmem>>, vector<1x4x256xf32>
    %21 = vector.shape_cast %20 : vector<1x4x256xf32> to vector<4x256xf32>
    %c1_11 = arith.constant 1 : index
    %c0_12 = arith.constant 0 : index
    %c0_13 = arith.constant 0 : index
    %22 = vector.load %arg2[%c1_11, %c0_12, %c0_13] : memref<2x4x256xf32, #tpu.memory_space<vmem>>, vector<1x4x256xf32>
    %23 = vector.shape_cast %22 : vector<1x4x256xf32> to vector<4x256xf32>
    %c1_14 = arith.constant 1 : index
    %c0_15 = arith.constant 0 : index
    %c0_16 = arith.constant 0 : index
    %24 = vector.load %arg3[%c1_14, %c0_15, %c0_16] : memref<2x4x256xf32, #tpu.memory_space<vmem>>, vector<1x4x256xf32>
    %25 = vector.shape_cast %24 : vector<1x4x256xf32> to vector<4x256xf32>
    %26 = tpu.concatenate %21, %23, %25 in 0 : vector<4x256xf32>, vector<4x256xf32>, vector<4x256xf32> -> vector<12x256xf32>
    %27 = arith.truncf %26 : vector<12x256xf32> to vector<12x256xbf16>
    %cst_17 = arith.constant 0.000000e+00 : bf16
    %28 = vector.broadcast %cst_17 : bf16 to vector<4x256xbf16>
    %29 = tpu.concatenate %27, %28 in 0 : vector<12x256xbf16>, vector<4x256xbf16> -> vector<16x256xbf16>
    %cst_18 = arith.constant 0.000000e+00 : bf16
    %30 = vector.broadcast %cst_18 : bf16 to vector<16x3xbf16>
    %31 = tpu.concatenate %30, %29, %30 in 1 : vector<16x3xbf16>, vector<16x256xbf16>, vector<16x3xbf16> -> vector<16x262xbf16>
    %32 = vector.extract_strided_slice %31 {offsets = [0, 0], sizes = [16, 256], strides = [1, 1]} : vector<16x262xbf16> to vector<16x256xbf16>
    %33 = vector.extract_strided_slice %31 {offsets = [0, 1], sizes = [16, 256], strides = [1, 1]} : vector<16x262xbf16> to vector<16x256xbf16>
    %34 = vector.extract_strided_slice %31 {offsets = [0, 2], sizes = [16, 256], strides = [1, 1]} : vector<16x262xbf16> to vector<16x256xbf16>
    %35 = vector.extract_strided_slice %31 {offsets = [0, 3], sizes = [16, 256], strides = [1, 1]} : vector<16x262xbf16> to vector<16x256xbf16>
    %36 = vector.extract_strided_slice %31 {offsets = [0, 4], sizes = [16, 256], strides = [1, 1]} : vector<16x262xbf16> to vector<16x256xbf16>
    %37 = vector.extract_strided_slice %31 {offsets = [0, 5], sizes = [16, 256], strides = [1, 1]} : vector<16x262xbf16> to vector<16x256xbf16>
    %38 = vector.extract_strided_slice %31 {offsets = [0, 6], sizes = [16, 256], strides = [1, 1]} : vector<16x262xbf16> to vector<16x256xbf16>
    %39 = tpu.concatenate %32, %33, %34, %35, %36, %37, %38 in 0 : vector<16x256xbf16>, vector<16x256xbf16>, vector<16x256xbf16>, vector<16x256xbf16>, vector<16x256xbf16>, vector<16x256xbf16>, vector<16x256xbf16> -> vector<112x256xbf16>
    %40 = tpu.concatenate %19, %39 in 1 : vector<112x256xbf16>, vector<112x256xbf16> -> vector<112x512xbf16>
    %c0_19 = arith.constant 0 : index
    %c0_20 = arith.constant 0 : index
    %41 = vector.load %arg4[%c0_19, %c0_20] : memref<24x112xbf16, #tpu.memory_space<vmem>>, vector<24x112xbf16>
    %cst_21 = arith.constant dense<0.000000e+00> : vector<24x512xf32>
    %42 = tpu.matmul %41, %40, %cst_21 {dimension_numbers = #tpu.dot_dimension_numbers<[1], [0], [0], [1], [0, 0, 1, 1], [], []>} : vector<24x112xbf16>, vector<112x512xbf16>, vector<24x512xf32> -> vector<24x512xf32>
    %c0_22 = arith.constant 0 : index
    %c0_23 = arith.constant 0 : index
    %43 = vector.load %arg5[%c0_22, %c0_23] : memref<24x1xf32, #tpu.memory_space<vmem>>, vector<24x1xf32>
    %44 = vector.broadcast %43 : vector<24x1xf32> to vector<24x512xf32>
    %45 = arith.addf %42, %44 : vector<24x512xf32>
    %cst_24 = arith.constant 5.000000e-01 : f32
    %46 = vector.broadcast %cst_24 : f32 to vector<24x512xf32>
    %47 = arith.mulf %46, %45 : vector<24x512xf32>
    %cst_25 = arith.constant 0.707106769 : f32
    %48 = vector.broadcast %cst_25 : f32 to vector<24x512xf32>
    %49 = arith.mulf %45, %48 : vector<24x512xf32>
    %cst_26 = arith.constant 0.000000e+00 : f32
    %50 = vector.broadcast %cst_26 : f32 to vector<24x512xf32>
    %51 = arith.cmpf oge, %49, %50 : vector<24x512xf32>
    %cst_27 = arith.constant 1.000000e+00 : f32
    %cst_28 = arith.constant -1.000000e+00 : f32
    %52 = vector.broadcast %cst_27 : f32 to vector<24x512xf32>
    %53 = vector.broadcast %cst_28 : f32 to vector<24x512xf32>
    %54 = arith.select %51, %52, %53 : vector<24x512xi1>, vector<24x512xf32>
    %55 = math.absf %49 : vector<24x512xf32>
    %cst_29 = arith.constant 0.327591091 : f32
    %56 = vector.broadcast %cst_29 : f32 to vector<24x512xf32>
    %57 = arith.mulf %56, %55 : vector<24x512xf32>
    %cst_30 = arith.constant 1.000000e+00 : f32
    %58 = vector.broadcast %cst_30 : f32 to vector<24x512xf32>
    %59 = arith.addf %58, %57 : vector<24x512xf32>
    %cst_31 = arith.constant 1.000000e+00 : f32
    %60 = vector.broadcast %cst_31 : f32 to vector<24x512xf32>
    %61 = arith.divf %60, %59 : vector<24x512xf32>
    %cst_32 = arith.constant 1.06140542 : f32
    %62 = vector.broadcast %cst_32 : f32 to vector<24x512xf32>
    %63 = arith.mulf %62, %61 : vector<24x512xf32>
    %cst_33 = arith.constant -1.45315206 : f32
    %64 = vector.broadcast %cst_33 : f32 to vector<24x512xf32>
    %65 = arith.addf %63, %64 : vector<24x512xf32>
    %66 = arith.mulf %65, %61 : vector<24x512xf32>
    %cst_34 = arith.constant 1.42141378 : f32
    %67 = vector.broadcast %cst_34 : f32 to vector<24x512xf32>
    %68 = arith.addf %66, %67 : vector<24x512xf32>
    %69 = arith.mulf %68, %61 : vector<24x512xf32>
    %cst_35 = arith.constant -0.284496725 : f32
    %70 = vector.broadcast %cst_35 : f32 to vector<24x512xf32>
    %71 = arith.addf %69, %70 : vector<24x512xf32>
    %72 = arith.mulf %71, %61 : vector<24x512xf32>
    %cst_36 = arith.constant 0.254829586 : f32
    %73 = vector.broadcast %cst_36 : f32 to vector<24x512xf32>
    %74 = arith.addf %72, %73 : vector<24x512xf32>
    %75 = arith.mulf %74, %61 : vector<24x512xf32>
    %cst_37 = arith.constant 0.000000e+00 : f32
    %76 = vector.broadcast %cst_37 : f32 to vector<24x512xf32>
    %77 = arith.subf %76, %55 : vector<24x512xf32>
    %78 = arith.mulf %77, %55 : vector<24x512xf32>
    %79 = math.exp %78 : vector<24x512xf32>
    %80 = arith.mulf %75, %79 : vector<24x512xf32>
    %cst_38 = arith.constant 1.000000e+00 : f32
    %81 = vector.broadcast %cst_38 : f32 to vector<24x512xf32>
    %82 = arith.subf %81, %80 : vector<24x512xf32>
    %83 = arith.mulf %54, %82 : vector<24x512xf32>
    %cst_39 = arith.constant 1.000000e+00 : f32
    %84 = vector.broadcast %cst_39 : f32 to vector<24x512xf32>
    %85 = arith.addf %84, %83 : vector<24x512xf32>
    %86 = arith.mulf %47, %85 : vector<24x512xf32>
    %87 = arith.truncf %86 : vector<24x512xf32> to vector<24x512xbf16>
    %cst_40 = arith.constant 0.000000e+00 : bf16
    %88 = vector.broadcast %cst_40 : bf16 to vector<24x3xbf16>
    %89 = vector.extract_strided_slice %87 {offsets = [0, 0], sizes = [24, 256], strides = [1, 1]} : vector<24x512xbf16> to vector<24x256xbf16>
    %90 = tpu.concatenate %88, %89, %88 in 1 : vector<24x3xbf16>, vector<24x256xbf16>, vector<24x3xbf16> -> vector<24x262xbf16>
    %91 = vector.extract_strided_slice %90 {offsets = [0, 0], sizes = [24, 256], strides = [1, 1]} : vector<24x262xbf16> to vector<24x256xbf16>
    %92 = vector.extract_strided_slice %90 {offsets = [0, 1], sizes = [24, 256], strides = [1, 1]} : vector<24x262xbf16> to vector<24x256xbf16>
    %93 = vector.extract_strided_slice %90 {offsets = [0, 2], sizes = [24, 256], strides = [1, 1]} : vector<24x262xbf16> to vector<24x256xbf16>
    %94 = vector.extract_strided_slice %90 {offsets = [0, 3], sizes = [24, 256], strides = [1, 1]} : vector<24x262xbf16> to vector<24x256xbf16>
    %95 = vector.extract_strided_slice %90 {offsets = [0, 4], sizes = [24, 256], strides = [1, 1]} : vector<24x262xbf16> to vector<24x256xbf16>
    %96 = vector.extract_strided_slice %90 {offsets = [0, 5], sizes = [24, 256], strides = [1, 1]} : vector<24x262xbf16> to vector<24x256xbf16>
    %97 = vector.extract_strided_slice %90 {offsets = [0, 6], sizes = [24, 256], strides = [1, 1]} : vector<24x262xbf16> to vector<24x256xbf16>
    %98 = tpu.concatenate %91, %92, %93, %94, %95, %96, %97 in 0 : vector<24x256xbf16>, vector<24x256xbf16>, vector<24x256xbf16>, vector<24x256xbf16>, vector<24x256xbf16>, vector<24x256xbf16>, vector<24x256xbf16> -> vector<168x256xbf16>
    %99 = vector.extract_strided_slice %87 {offsets = [0, 256], sizes = [24, 256], strides = [1, 1]} : vector<24x512xbf16> to vector<24x256xbf16>
    %100 = tpu.concatenate %88, %99, %88 in 1 : vector<24x3xbf16>, vector<24x256xbf16>, vector<24x3xbf16> -> vector<24x262xbf16>
    %101 = vector.extract_strided_slice %100 {offsets = [0, 0], sizes = [24, 256], strides = [1, 1]} : vector<24x262xbf16> to vector<24x256xbf16>
    %102 = vector.extract_strided_slice %100 {offsets = [0, 1], sizes = [24, 256], strides = [1, 1]} : vector<24x262xbf16> to vector<24x256xbf16>
    %103 = vector.extract_strided_slice %100 {offsets = [0, 2], sizes = [24, 256], strides = [1, 1]} : vector<24x262xbf16> to vector<24x256xbf16>
    %104 = vector.extract_strided_slice %100 {offsets = [0, 3], sizes = [24, 256], strides = [1, 1]} : vector<24x262xbf16> to vector<24x256xbf16>
    %105 = vector.extract_strided_slice %100 {offsets = [0, 4], sizes = [24, 256], strides = [1, 1]} : vector<24x262xbf16> to vector<24x256xbf16>
    %106 = vector.extract_strided_slice %100 {offsets = [0, 5], sizes = [24, 256], strides = [1, 1]} : vector<24x262xbf16> to vector<24x256xbf16>
    %107 = vector.extract_strided_slice %100 {offsets = [0, 6], sizes = [24, 256], strides = [1, 1]} : vector<24x262xbf16> to vector<24x256xbf16>
    %108 = tpu.concatenate %101, %102, %103, %104, %105, %106, %107 in 0 : vector<24x256xbf16>, vector<24x256xbf16>, vector<24x256xbf16>, vector<24x256xbf16>, vector<24x256xbf16>, vector<24x256xbf16>, vector<24x256xbf16> -> vector<168x256xbf16>
    %109 = tpu.concatenate %98, %108 in 1 : vector<168x256xbf16>, vector<168x256xbf16> -> vector<168x512xbf16>
    %c0_41 = arith.constant 0 : index
    %c0_42 = arith.constant 0 : index
    %110 = vector.load %arg6[%c0_41, %c0_42] : memref<8x168xbf16, #tpu.memory_space<vmem>>, vector<8x168xbf16>
    %cst_43 = arith.constant dense<0.000000e+00> : vector<8x512xf32>
    %111 = tpu.matmul %110, %109, %cst_43 {dimension_numbers = #tpu.dot_dimension_numbers<[1], [0], [0], [1], [0, 0, 1, 1], [], []>} : vector<8x168xbf16>, vector<168x512xbf16>, vector<8x512xf32> -> vector<8x512xf32>
    %c0_44 = arith.constant 0 : index
    %c0_45 = arith.constant 0 : index
    %112 = vector.load %arg7[%c0_44, %c0_45] : memref<8x1xf32, #tpu.memory_space<vmem>>, vector<8x1xf32>
    %113 = vector.broadcast %112 : vector<8x1xf32> to vector<8x512xf32>
    %114 = arith.addf %111, %113 : vector<8x512xf32>
    %115 = vector.extract_strided_slice %114 {offsets = [0, 0], sizes = [8, 256], strides = [1, 1]} : vector<8x512xf32> to vector<8x256xf32>
    %116 = vector.extract_strided_slice %115 {offsets = [0, 0], sizes = [4, 256], strides = [1, 1]} : vector<8x256xf32> to vector<4x256xf32>
    %c0_46 = arith.constant 0 : index
    %c0_47 = arith.constant 0 : index
    %c0_48 = arith.constant 0 : index
    %117 = vector.load %arg8[%c0_46, %c0_47, %c0_48] : memref<2x4x256xf32, #tpu.memory_space<vmem>>, vector<1x4x256xf32>
    %118 = vector.shape_cast %117 : vector<1x4x256xf32> to vector<4x256xf32>
    %119 = vector.shape_cast %116 : vector<4x256xf32> to vector<1x4x256xf32>
    tpu.vector_store %arg8[%c0_46, %c0_47, %c0_48], %119 {strides = array<i32>} : memref<2x4x256xf32, #tpu.memory_space<vmem>>, vector<1x4x256xf32>,
    %120 = vector.extract_strided_slice %115 {offsets = [4, 0], sizes = [4, 256], strides = [1, 1]} : vector<8x256xf32> to vector<4x256xf32>
    %c0_49 = arith.constant 0 : index
    %c0_50 = arith.constant 0 : index
    %c0_51 = arith.constant 0 : index
    %121 = vector.load %arg9[%c0_49, %c0_50, %c0_51] : memref<2x4x256xf32, #tpu.memory_space<vmem>>, vector<1x4x256xf32>
    %122 = vector.shape_cast %121 : vector<1x4x256xf32> to vector<4x256xf32>
    %123 = vector.shape_cast %120 : vector<4x256xf32> to vector<1x4x256xf32>
    tpu.vector_store %arg9[%c0_49, %c0_50, %c0_51], %123 {strides = array<i32>} : memref<2x4x256xf32, #tpu.memory_space<vmem>>, vector<1x4x256xf32>,
    %124 = vector.extract_strided_slice %114 {offsets = [0, 256], sizes = [8, 256], strides = [1, 1]} : vector<8x512xf32> to vector<8x256xf32>
    %125 = vector.extract_strided_slice %124 {offsets = [0, 0], sizes = [4, 256], strides = [1, 1]} : vector<8x256xf32> to vector<4x256xf32>
    %c1_52 = arith.constant 1 : index
    %c0_53 = arith.constant 0 : index
    %c0_54 = arith.constant 0 : index
    %126 = vector.load %arg8[%c1_52, %c0_53, %c0_54] : memref<2x4x256xf32, #tpu.memory_space<vmem>>, vector<1x4x256xf32>
    %127 = vector.shape_cast %126 : vector<1x4x256xf32> to vector<4x256xf32>
    %128 = vector.shape_cast %125 : vector<4x256xf32> to vector<1x4x256xf32>
    tpu.vector_store %arg8[%c1_52, %c0_53, %c0_54], %128 {strides = array<i32>} : memref<2x4x256xf32, #tpu.memory_space<vmem>>, vector<1x4x256xf32>,
    %129 = vector.extract_strided_slice %124 {offsets = [4, 0], sizes = [4, 256], strides = [1, 1]} : vector<8x256xf32> to vector<4x256xf32>
    %c1_55 = arith.constant 1 : index
    %c0_56 = arith.constant 0 : index
    %c0_57 = arith.constant 0 : index
    %130 = vector.load %arg9[%c1_55, %c0_56, %c0_57] : memref<2x4x256xf32, #tpu.memory_space<vmem>>, vector<1x4x256xf32>
    %131 = vector.shape_cast %130 : vector<1x4x256xf32> to vector<4x256xf32>
    %132 = vector.shape_cast %129 : vector<4x256xf32> to vector<1x4x256xf32>
    tpu.vector_store %arg9[%c1_55, %c0_56, %c0_57], %132 {strides = array<i32>} : memref<2x4x256xf32, #tpu.memory_space<vmem>>, vector<1x4x256xf32>,
    return
  }
  func.func @transform_0(%arg0: i32) -> (i32, i32, i32) {
    %c0_i32 = arith.constant 0 : i32
    %c0_i32_0 = arith.constant 0 : i32
    %c0_i32_1 = arith.constant 0 : i32
    return %arg0, %c0_i32, %c0_i32_0 : i32, i32, i32
  }
  func.func @transform_1(%arg0: i32) -> (i32, i32, i32) {
    %c0_i32 = arith.constant 0 : i32
    %c0_i32_0 = arith.constant 0 : i32
    %c0_i32_1 = arith.constant 0 : i32
    return %arg0, %c0_i32, %c0_i32_0 : i32, i32, i32
  }
  func.func @transform_2(%arg0: i32) -> (i32, i32, i32) {
    %c0_i32 = arith.constant 0 : i32
    %c0_i32_0 = arith.constant 0 : i32
    %c0_i32_1 = arith.constant 0 : i32
    return %arg0, %c0_i32, %c0_i32_0 : i32, i32, i32
  }
  func.func @transform_3(%arg0: i32) -> (i32, i32) {
    %c0_i32 = arith.constant 0 : i32
    %c0_i32_0 = arith.constant 0 : i32
    %c0_i32_1 = arith.constant 0 : i32
    return %c0_i32, %c0_i32_0 : i32, i32
  }
  func.func @transform_4(%arg0: i32) -> (i32, i32) {
    %c0_i32 = arith.constant 0 : i32
    %c0_i32_0 = arith.constant 0 : i32
    %c0_i32_1 = arith.constant 0 : i32
    return %c0_i32, %c0_i32_0 : i32, i32
  }
  func.func @transform_5(%arg0: i32) -> (i32, i32) {
    %c0_i32 = arith.constant 0 : i32
    %c0_i32_0 = arith.constant 0 : i32
    %c0_i32_1 = arith.constant 0 : i32
    return %c0_i32, %c0_i32_0 : i32, i32
  }
  func.func @transform_6(%arg0: i32) -> (i32, i32) {
    %c0_i32 = arith.constant 0 : i32
    %c0_i32_0 = arith.constant 0 : i32
    %c0_i32_1 = arith.constant 0 : i32
    return %c0_i32, %c0_i32_0 : i32, i32
  }
  func.func @transform_7(%arg0: i32) -> (i32, i32, i32) {
    %c0_i32 = arith.constant 0 : i32
    %c0_i32_0 = arith.constant 0 : i32
    %c0_i32_1 = arith.constant 0 : i32
    return %arg0, %c0_i32, %c0_i32_0 : i32, i32, i32
  }
  func.func @transform_8(%arg0: i32) -> (i32, i32, i32) {
    %c0_i32 = arith.constant 0 : i32
    %c0_i32_0 = arith.constant 0 : i32
    %c0_i32_1 = arith.constant 0 : i32
    return %arg0, %c0_i32, %c0_i32_0 : i32, i32, i32
  }
}

</mosaic_0001>

<llo_original>
// kernel: mol_translator_apply.1
$region0: #{mol_translator_apply.1}
  #allocation0 [shape = 'u32[]', space=smem, size = 0x4, offset = 0x4, fixed_abs, tag = 'smem constant byte address 0x4 - core index']
  #allocation1 [shape = 'u32[144,128]{1,0:T(1,128)}', space=vmem, size = 0x12000, scoped, tag = 'internal scratch']
  %s0 = inlined_call_operand.vmem [shape: f32[2,4,256], index: 0, kind: input, shape index: {}]
  %s1 = inlined_call_operand.vmem [shape: f32[2,4,256], index: 1, kind: input, shape index: {}]
  %s2 = inlined_call_operand.vmem [shape: f32[2,4,256], index: 2, kind: input, shape index: {}]
  %s3 = inlined_call_operand.hbm [shape: bf16[24,112], index: 3, kind: input, shape index: {}]
  %s4 = inlined_call_operand.vmem [shape: f32[24,1], index: 4, kind: input, shape index: {}]
  %s5 = inlined_call_operand.hbm [shape: bf16[8,168], index: 5, kind: input, shape index: {}]
  %s6 = inlined_call_operand.vmem [shape: f32[8,1], index: 6, kind: input, shape index: {}]
  %s7 = inlined_call_operand.hbm [shape: f32[2,4,256], index: 7, kind: output, shape index: {0}]
  %s8 = inlined_call_operand.hbm [shape: f32[2,4,256], index: 8, kind: output, shape index: {1}]
  %9 = xla_tuple %s7, %s8
  %s10 = sld [smem:[#allocation0]]
  $region54: #{mol_translator_apply.1} parent=0
    _
  %s12 = ssub.s32 1, %s10
  %s13 = scalar_select 0, %s12, %s10
  $region1: #{mol_translator_apply.1} parent=0
    #allocation2 [shape = 'u8[6144]{0}', space=vmem, size = 0x1800, scoped, tag = 'input window, operand 3, single buffered']
    #allocation3 [shape = 's32[1]{0}', space=sflag, size = 0x4, scoped, tag = 'scoped memory for mol_translator_apply.1']
    #allocation4 [shape = 's32[1]{0}', space=sflag, size = 0x4, scoped, tag = 'scoped memory for mol_translator_apply.1']
    #allocation5 [shape = 'u8[4096]{0}', space=vmem, size = 0x1000, scoped, tag = 'input window, operand 5, single buffered']
    #allocation6 [shape = 's32[1]{0}', space=sflag, size = 0x4, scoped, tag = 'scoped memory for mol_translator_apply.1']
    #allocation7 [shape = 'u8[8192]{0}', space=vmem, size = 0x2000, scoped, tag = 'output window, operand 0, single buffered']
    #allocation8 [shape = 'u8[8192]{0}', space=vmem, size = 0x2000, scoped, tag = 'output window, operand 1, single buffered']
    #allocation9 [shape = 's32[1]{0}', space=sflag, size = 0x4, scoped, tag = 'scoped memory for mol_translator_apply.1']
    %14 = vsyncpa [#allocation3], 0
    %15 = vsyncpa [#allocation6], 0
    %16 = vsyncpa [#allocation4], 0
    %17 = vsyncpa [#allocation9], 0
    // Predicated region
    $region2: #{mol_translator_apply.1} parent=1 // pred_check
      _
    $region3: #{mol_translator_apply.1} parent=1 // pred_check_branch
      %19 = sbr.rel (0) target = $region5
    $region4: #{mol_translator_apply.1} parent=1 // pred_region
      _
    $region5: #{mol_translator_apply.1} parent=1 // pred_fallthru
      _
    // Predicated region
    $region6: #{mol_translator_apply.1} parent=1 // pred_check
      _
    $region7: #{mol_translator_apply.1} parent=1 // pred_check_branch
      %21 = sbr.rel (0) target = $region9
    $region8: #{mol_translator_apply.1} parent=1 // pred_region
      _
    $region9: #{mol_translator_apply.1} parent=1 // pred_fallthru
      _
    // Predicated region
    $region10: #{mol_translator_apply.1} parent=1 // pred_check
      _
    $region11: #{mol_translator_apply.1} parent=1 // pred_check_branch
      %23 = sbr.rel (0) target = $region13
    $region12: #{mol_translator_apply.1} parent=1 // pred_region
      _
    $region13: #{mol_translator_apply.1} parent=1 // pred_fallthru
      _
    // Predicated region
    $region14: #{mol_translator_apply.1} parent=1 // pred_check
      _
    $region15: #{mol_translator_apply.1} parent=1 // pred_check_branch
      %25 = sbr.rel (0) target = $region17
    $region16: #{mol_translator_apply.1} parent=1 // pred_region
      %s27 = ssub.s32 192, 192
      %28 = vsyncadd [#allocation3], %s27
      %s29 = sshll.u32 [#allocation2], 4
      %s30 = int_to_ptr.vmem [resolvable:$true] %s29
      %35 = dma.hbm_to_vmem [thread:$0]  %s3, 192, %s30, [#allocation3], 64, 64, 4
    $region17: #{mol_translator_apply.1} parent=1 // pred_fallthru
      _
    // Predicated region
    $region18: #{mol_translator_apply.1} parent=1 // pred_check
      _
    $region19: #{mol_translator_apply.1} parent=1 // pred_check_branch
      %37 = sbr.rel (0) target = $region21
    $region20: #{mol_translator_apply.1} parent=1 // pred_region
      _
    $region21: #{mol_translator_apply.1} parent=1 // pred_fallthru
      _
    // Predicated region
    $region22: #{mol_translator_apply.1} parent=1 // pred_check
      _
    $region23: #{mol_translator_apply.1} parent=1 // pred_check_branch
      %39 = sbr.rel (0) target = $region25
    $region24: #{mol_translator_apply.1} parent=1 // pred_region
      %s41 = ssub.s32 128, 128
      %42 = vsyncadd [#allocation6], %s41
      %s44 = sshll.u32 [#allocation5], 4
      %s45 = int_to_ptr.vmem [resolvable:$true] %s44
      %47 = dma.hbm_to_vmem [thread:$0]  %s5, 128, %s45, [#allocation6]
    $region25: #{mol_translator_apply.1} parent=1 // pred_fallthru
      _
    // Predicated region
    $region26: #{mol_translator_apply.1} parent=1 // pred_check
      _
    $region27: #{mol_translator_apply.1} parent=1 // pred_check_branch
      %49 = sbr.rel (0) target = $region29
    $region28: #{mol_translator_apply.1} parent=1 // pred_region
      _
    $region29: #{mol_translator_apply.1} parent=1 // pred_fallthru
      _
    // Predicated region
    $region30: #{mol_translator_apply.1} parent=1 // pred_check
      _
    $region31: #{mol_translator_apply.1} parent=1 // pred_check_branch
      %51 = sbr.rel (0) target = $region33
    $region32: #{mol_translator_apply.1} parent=1 // pred_region
      %52 = dma.done [#allocation3], 192
    $region33: #{mol_translator_apply.1} parent=1 // pred_fallthru
      _
    // Predicated region
    $region34: #{mol_translator_apply.1} parent=1 // pred_check
      _
    $region35: #{mol_translator_apply.1} parent=1 // pred_check_branch
      %54 = sbr.rel (0) target = $region37
    $region36: #{mol_translator_apply.1} parent=1 // pred_region
      %55 = dma.done [#allocation6], 128
    $region37: #{mol_translator_apply.1} parent=1 // pred_fallthru
      _
    %v57 = vld [vmem:[%s0] sm:$0xff]
    %v58 = vld [vmem:[%s1] sm:$0xff]
    %v59 = vld [vmem:[%s2] sm:$0xff]
    %v61 = vcombine.high %v57, %v57
    %v64 = vcombine.low %v58, %v58
    %v67 = vcombine.high %v59, %v59
    %vm69 = vcmask 1043456
    %v70 = vsel %vm69, %v57, %v64
    %v71 = vsel %vm69, %v61, %v58
    %v72 = vpack.c.bf16 %v59, %v70
    %v73 = vpack.c.bf16 %v67, %v71
    %vm74 = vcmask 1045504
    %v77 = vsel %vm74, %v72, 0
    %v79 = vsel %vm74, %v73, 0
    %82 = vrot.lane.b32.xlu0 %v77, 3
    %v83 = vpop.permute.xlu0 %82
    %84 = vrot.lane.b32.xlu0 %v79, 3
    %v85 = vpop.permute.xlu0 %84
    %vm86 = vcmask 23552
    %v87 = vsel %vm86, %v83, %v85
    %vm89 = vcmask 23552
    %v91 = vsel %vm89, 0, %v83
    %v94 = vsel %vm89, %v85, 0
    %97 = vrot.lane.b32.xlu0 %v91, 127
    %v98 = vpop.permute.xlu0 %97
    %99 = vrot.lane.b32.xlu0 %v87, 127
    %v100 = vpop.permute.xlu0 %99
    %101 = vrot.lane.b32.xlu0 %v94, 127
    %v102 = vpop.permute.xlu0 %101
    %vm103 = vcmask 1039360
    %v104 = vsel %vm103, %v98, %v100
    %v105 = vsel %vm103, %v100, %v102
    %108 = vrot.lane.b32.xlu0 %v91, 126
    %v109 = vpop.permute.xlu0 %108
    %110 = vrot.lane.b32.xlu0 %v87, 126
    %v111 = vpop.permute.xlu0 %110
    %112 = vrot.lane.b32.xlu0 %v94, 126
    %v113 = vpop.permute.xlu0 %112
    %vm114 = vcmask 1031168
    %v115 = vsel %vm114, %v109, %v111
    %v116 = vsel %vm114, %v111, %v113
    %119 = vrot.lane.b32.xlu0 %v91, 125
    %v120 = vpop.permute.xlu0 %119
    %121 = vrot.lane.b32.xlu0 %v87, 125
    %v122 = vpop.permute.xlu0 %121
    %123 = vrot.lane.b32.xlu0 %v94, 125
    %v124 = vpop.permute.xlu0 %123
    %vm125 = vcmask 1022976
    %v126 = vsel %vm125, %v120, %v122
    %v127 = vsel %vm125, %v122, %v124
    %130 = vrot.lane.b32.xlu0 %v91, 124
    %v131 = vpop.permute.xlu0 %130
    %132 = vrot.lane.b32.xlu0 %v87, 124
    %v133 = vpop.permute.xlu0 %132
    %134 = vrot.lane.b32.xlu0 %v94, 124
    %v135 = vpop.permute.xlu0 %134
    %vm136 = vcmask 1014784
    %v137 = vsel %vm136, %v131, %v133
    %v138 = vsel %vm136, %v133, %v135
    %141 = vrot.lane.b32.xlu0 %v91, 123
    %v142 = vpop.permute.xlu0 %141
    %143 = vrot.lane.b32.xlu0 %v87, 123
    %v144 = vpop.permute.xlu0 %143
    %145 = vrot.lane.b32.xlu0 %v94, 123
    %v146 = vpop.permute.xlu0 %145
    %vm147 = vcmask 1006592
    %v148 = vsel %vm147, %v142, %v144
    %v149 = vsel %vm147, %v144, %v146
    %152 = vrot.lane.b32.xlu0 %v91, 122
    %v153 = vpop.permute.xlu0 %152
    %154 = vrot.lane.b32.xlu0 %v87, 122
    %v155 = vpop.permute.xlu0 %154
    %156 = vrot.lane.b32.xlu0 %v94, 122
    %v157 = vpop.permute.xlu0 %156
    %vm158 = vcmask 998400
    %v159 = vsel %vm158, %v153, %v155
    %v160 = vsel %vm158, %v155, %v157
    %s163 = scalar_lea.vmem %s0, 8
    %v164 = vld [vmem:[%s163] sm:$0xff]
    %s165 = scalar_lea.vmem %s1, 8
    %v166 = vld [vmem:[%s165] sm:$0xff]
    %s167 = scalar_lea.vmem %s2, 8
    %v168 = vld [vmem:[%s167] sm:$0xff]
    %v170 = vcombine.high %v164, %v164
    %v173 = vcombine.low %v166, %v166
    %v176 = vcombine.high %v168, %v168
    %v178 = vsel %vm69, %v164, %v173
    %v179 = vsel %vm69, %v170, %v166
    %v180 = vpack.c.bf16 %v168, %v178
    %v181 = vpack.c.bf16 %v176, %v179
    %v183 = vsel %vm74, %v180, 0
    %v185 = vsel %vm74, %v181, 0
    %188 = vrot.lane.b32.xlu0 %v183, 3
    %v189 = vpop.permute.xlu0 %188
    %190 = vrot.lane.b32.xlu0 %v185, 3
    %v191 = vpop.permute.xlu0 %190
    %v192 = vsel %vm86, %v189, %v191
    %v195 = vsel %vm89, 0, %v189
    %v198 = vsel %vm89, %v191, 0
    %201 = vrot.lane.b32.xlu0 %v195, 127
    %v202 = vpop.permute.xlu0 %201
    %203 = vrot.lane.b32.xlu0 %v192, 127
    %v204 = vpop.permute.xlu0 %203
    %205 = vrot.lane.b32.xlu0 %v198, 127
    %v206 = vpop.permute.xlu0 %205
    %v207 = vsel %vm103, %v202, %v204
    %v208 = vsel %vm103, %v204, %v206
    %211 = vrot.lane.b32.xlu0 %v195, 126
    %v212 = vpop.permute.xlu0 %211
    %213 = vrot.lane.b32.xlu0 %v192, 126
    %v214 = vpop.permute.xlu0 %213
    %215 = vrot.lane.b32.xlu0 %v198, 126
    %v216 = vpop.permute.xlu0 %215
    %v217 = vsel %vm114, %v212, %v214
    %v218 = vsel %vm114, %v214, %v216
    %221 = vrot.lane.b32.xlu0 %v195, 125
    %v222 = vpop.permute.xlu0 %221
    %223 = vrot.lane.b32.xlu0 %v192, 125
    %v224 = vpop.permute.xlu0 %223
    %225 = vrot.lane.b32.xlu0 %v198, 125
    %v226 = vpop.permute.xlu0 %225
    %v227 = vsel %vm125, %v222, %v224
    %v228 = vsel %vm125, %v224, %v226
    %231 = vrot.lane.b32.xlu0 %v195, 124
    %v232 = vpop.permute.xlu0 %231
    %233 = vrot.lane.b32.xlu0 %v192, 124
    %v234 = vpop.permute.xlu0 %233
    %235 = vrot.lane.b32.xlu0 %v198, 124
    %v236 = vpop.permute.xlu0 %235
    %v237 = vsel %vm136, %v232, %v234
    %v238 = vsel %vm136, %v234, %v236
    %241 = vrot.lane.b32.xlu0 %v195, 123
    %v242 = vpop.permute.xlu0 %241
    %243 = vrot.lane.b32.xlu0 %v192, 123
    %v244 = vpop.permute.xlu0 %243
    %245 = vrot.lane.b32.xlu0 %v198, 123
    %v246 = vpop.permute.xlu0 %245
    %v247 = vsel %vm147, %v242, %v244
    %v248 = vsel %vm147, %v244, %v246
    %251 = vrot.lane.b32.xlu0 %v195, 122
    %v252 = vpop.permute.xlu0 %251
    %253 = vrot.lane.b32.xlu0 %v192, 122
    %v254 = vpop.permute.xlu0 %253
    %255 = vrot.lane.b32.xlu0 %v198, 122
    %v256 = vpop.permute.xlu0 %255
    %v257 = vsel %vm158, %v252, %v254
    %v258 = vsel %vm158, %v254, %v256
    %v261 = vld [vmem:[#allocation2] sm:$0xf]
    %v262 = vld [vmem:[#allocation2 + $0x4] sm:$0xf]
    %v263 = vld [vmem:[#allocation2 + $0x8] sm:$0xf]
    %v264 = vld [vmem:[%s4] sm:$0xff]
    %v265 = vld [vmem:[%s4 + $0x8] sm:$0xff]
    %v266 = vld [vmem:[%s4 + $0x10] sm:$0xff]
    %268 = vset.pattern.permute.xlu0 0
    %269 = vperm.xlu0 %268, %v264
    %v270 = vpop.permute.xlu0 %269
    %273 = vset.pattern.permute.xlu0 0
    %274 = vperm.xlu0 %273, %v265
    %v275 = vpop.permute.xlu0 %274
    %278 = vset.pattern.permute.xlu0 0
    %279 = vperm.xlu0 %278, %v266
    %v280 = vpop.permute.xlu0 %279
    %v285 = vunpack.c.l.b16 %v261
    %v286 = vunpack.c.l.b16 %v262
    %v287 = vunpack.c.l.b16 %v263
    %v288 = vpack.c.b16 %v286, %v285
    %v289 = vpack.c.b16 %v287, %v287
    %vm290 = vcmask 916480
    %v292 = vsel %vm290, %v288, 0
    %v295 = vsel %vm290, %v289, 0
    %297 = vmatprep.subr.bf16.mxu0 %v87
    %298 = vmatpush1.bf16.msra.mxu0 %v91
    %299 = vmatprep.subr.bf16.mxu0 %v105
    %300 = vmatpush1.bf16.msra.mxu0 %v104
    %301 = vmatprep.subr.bf16.mxu0 %v116
    %302 = vmatpush1.bf16.msra.mxu0 %v115
    %303 = vmatprep.subr.bf16.mxu0 %v127
    %304 = vmatpush1.bf16.msra.mxu0 %v126
    %305 = vmatprep.subr.bf16.mxu0 %v138
    %306 = vmatpush1.bf16.msra.mxu0 %v137
    %307 = vmatprep.subr.bf16.mxu0 %v149
    %308 = vmatpush1.bf16.msra.mxu0 %v148
    %309 = vmatprep.subr.bf16.mxu0 %v160
    %310 = vmatpush1.bf16.msra.mxu0 %v159
    %311 = vmatprep.subr.bf16.mxu0 0
    %312 = vmatpush1.bf16.msra.mxu0 0
    %313 = vmatprep.subr.bf16.mxu0 0
    %314 = vmatpush1.bf16.msra.mxu0 0
    %315 = vmatprep.subr.bf16.mxu0 0
    %316 = vmatpush1.bf16.msra.mxu0 0
    %317 = vmatprep.subr.bf16.mxu0 0
    %318 = vmatpush1.bf16.msra.mxu0 0
    %319 = vmatprep.subr.bf16.mxu0 0
    %320 = vmatpush1.bf16.msra.mxu0 0
    %321 = vmatprep.subr.bf16.mxu0 0
    %322 = vmatpush1.bf16.msra.mxu0 0
    %323 = vmatprep.subr.bf16.mxu0 0
    %324 = vmatpush1.bf16.msra.mxu0 0
    %325 = vmatprep.subr.bf16.mxu0 0
    %326 = vmatpush1.bf16.msra.mxu0 0
    %327 = vmatprep.subr.bf16.mxu0 0
    %328 = vmatpush1.bf16.msra.mxu0 0
    %329 = vmatprep.mubr.bf16.mxu0 0
    %330 = vmatmul.mubr.bf16.gmra.mrb[0].mxu0 %v292
    %v331 = vpop.f32.mrb[0].mxu0
    %v332 = vadd.f32 %v270, %v331
    %v333 = vpop.f32.mrb[0].mxu0
    %v334 = vadd.f32 %v270, %v333
    %v335 = vpop.f32.mrb[0].mxu0
    %v336 = vadd.f32 %v275, %v335
    %v337 = vpop.f32.mrb[0].mxu0
    %v338 = vadd.f32 %v275, %v337
    %339 = vmatprep.mubr.bf16.mxu0 0
    %340 = vmatmul.mubr.bf16.gmra.mrb[0].mxu0 %v295
    %v341 = vpop.f32.mrb[0].mxu0
    %v342 = vadd.f32 %v280, %v341
    %v343 = vpop.f32.mrb[0].mxu0
    %v344 = vadd.f32 %v280, %v343
    %v345 = vpop.f32.mrb[0].mxu0
    %v346 = vpop.f32.mrb[0].mxu0
    %347 = vdwg.mxu0
    %348 = vmatprep.subr.bf16.mxu0 %v192
    %349 = vmatpush1.bf16.msra.mxu0 %v195
    %350 = vmatprep.subr.bf16.mxu0 %v208
    %351 = vmatpush1.bf16.msra.mxu0 %v207
    %352 = vmatprep.subr.bf16.mxu0 %v218
    %353 = vmatpush1.bf16.msra.mxu0 %v217
    %354 = vmatprep.subr.bf16.mxu0 %v228
    %355 = vmatpush1.bf16.msra.mxu0 %v227
    %356 = vmatprep.subr.bf16.mxu0 %v238
    %357 = vmatpush1.bf16.msra.mxu0 %v237
    %358 = vmatprep.subr.bf16.mxu0 %v248
    %359 = vmatpush1.bf16.msra.mxu0 %v247
    %360 = vmatprep.subr.bf16.mxu0 %v258
    %361 = vmatpush1.bf16.msra.mxu0 %v257
    %362 = vmatprep.subr.bf16.mxu0 0
    %363 = vmatpush1.bf16.msra.mxu0 0
    %364 = vmatprep.subr.bf16.mxu0 0
    %365 = vmatpush1.bf16.msra.mxu0 0
    %366 = vmatprep.subr.bf16.mxu0 0
    %367 = vmatpush1.bf16.msra.mxu0 0
    %368 = vmatprep.subr.bf16.mxu0 0
    %369 = vmatpush1.bf16.msra.mxu0 0
    %370 = vmatprep.subr.bf16.mxu0 0
    %371 = vmatpush1.bf16.msra.mxu0 0
    %372 = vmatprep.subr.bf16.mxu0 0
    %373 = vmatpush1.bf16.msra.mxu0 0
    %374 = vmatprep.subr.bf16.mxu0 0
    %375 = vmatpush1.bf16.msra.mxu0 0
    %376 = vmatprep.subr.bf16.mxu0 0
    %377 = vmatpush1.bf16.msra.mxu0 0
    %378 = vmatprep.subr.bf16.mxu0 0
    %379 = vmatpush1.bf16.msra.mxu0 0
    %380 = vmatprep.mubr.bf16.mxu0 0
    %381 = vmatmul.mubr.bf16.gmra.mrb[0].mxu0 %v292
    %v382 = vpop.f32.mrb[0].mxu0
    %v383 = vadd.f32 %v270, %v382
    %v384 = vpop.f32.mrb[0].mxu0
    %v385 = vadd.f32 %v270, %v384
    %v386 = vpop.f32.mrb[0].mxu0
    %v387 = vadd.f32 %v275, %v386
    %v388 = vpop.f32.mrb[0].mxu0
    %v389 = vadd.f32 %v275, %v388
    %390 = vmatprep.mubr.bf16.mxu0 0
    %391 = vmatmul.mubr.bf16.gmra.mrb[0].mxu0 %v295
    %v392 = vpop.f32.mrb[0].mxu0
    %v393 = vadd.f32 %v280, %v392
    %v394 = vpop.f32.mrb[0].mxu0
    %v395 = vadd.f32 %v280, %v394
    %v396 = vpop.f32.mrb[0].mxu0
    %v397 = vpop.f32.mrb[0].mxu0
    %398 = vdwg.mxu0
    %v399 = vmul.f32 %v332, 0.5
    %v400 = vmul.f32 %v334, 0.5
    %v401 = vmul.f32 %v383, 0.5
    %v402 = vmul.f32 %v385, 0.5
    %v403 = vmul.f32 %v336, 0.5
    %v404 = vmul.f32 %v338, 0.5
    %v405 = vmul.f32 %v387, 0.5
    %v406 = vmul.f32 %v389, 0.5
    %v407 = vmul.f32 %v342, 0.5
    %v408 = vmul.f32 %v344, 0.5
    %v409 = vmul.f32 %v393, 0.5
    %v410 = vmul.f32 %v395, 0.5
    %v411 = vmul.f32 %v332, 0.70710677
    %v412 = vmul.f32 %v334, 0.70710677
    %v413 = vmul.f32 %v383, 0.70710677
    %v414 = vmul.f32 %v385, 0.70710677
    %v415 = vmul.f32 %v336, 0.70710677
    %v416 = vmul.f32 %v338, 0.70710677
    %v417 = vmul.f32 %v387, 0.70710677
    %v418 = vmul.f32 %v389, 0.70710677
    %v419 = vmul.f32 %v342, 0.70710677
    %v420 = vmul.f32 %v344, 0.70710677
    %v421 = vmul.f32 %v393, 0.70710677
    %v422 = vmul.f32 %v395, 0.70710677
    %vm423 = vcmp.ge.f32.partialorder %v411, 0.0
    %vm424 = vcmp.ge.f32.partialorder %v412, 0.0
    %vm425 = vcmp.ge.f32.partialorder %v413, 0.0
    %vm426 = vcmp.ge.f32.partialorder %v414, 0.0
    %vm427 = vcmp.ge.f32.partialorder %v415, 0.0
    %vm428 = vcmp.ge.f32.partialorder %v416, 0.0
    %vm429 = vcmp.ge.f32.partialorder %v417, 0.0
    %vm430 = vcmp.ge.f32.partialorder %v418, 0.0
    %vm431 = vcmp.ge.f32.partialorder %v419, 0.0
    %vm432 = vcmp.ge.f32.partialorder %v420, 0.0
    %vm433 = vcmp.ge.f32.partialorder %v421, 0.0
    %vm434 = vcmp.ge.f32.partialorder %v422, 0.0
    %v435 = vsel %vm423, 1.0, -1.0
    %v436 = vsel %vm424, 1.0, -1.0
    %v437 = vsel %vm425, 1.0, -1.0
    %v438 = vsel %vm426, 1.0, -1.0
    %v439 = vsel %vm427, 1.0, -1.0
    %v440 = vsel %vm428, 1.0, -1.0
    %v441 = vsel %vm429, 1.0, -1.0
    %v442 = vsel %vm430, 1.0, -1.0
    %v443 = vsel %vm431, 1.0, -1.0
    %v444 = vsel %vm432, 1.0, -1.0
    %v445 = vsel %vm433, 1.0, -1.0
    %v446 = vsel %vm434, 1.0, -1.0
    %v447 = vand.u32 2147483647, %v411
    %v448 = vand.u32 2147483647, %v412
    %v449 = vand.u32 2147483647, %v413
    %v450 = vand.u32 2147483647, %v414
    %v451 = vand.u32 2147483647, %v415
    %v452 = vand.u32 2147483647, %v416
    %v453 = vand.u32 2147483647, %v417
    %v454 = vand.u32 2147483647, %v418
    %v455 = vand.u32 2147483647, %v419
    %v456 = vand.u32 2147483647, %v420
    %v457 = vand.u32 2147483647, %v421
    %v458 = vand.u32 2147483647, %v422
    %v459 = vmul.f32 %v447, 0.3275911
    %v460 = vmul.f32 %v448, 0.3275911
    %v461 = vmul.f32 %v449, 0.3275911
    %v462 = vmul.f32 %v450, 0.3275911
    %v463 = vmul.f32 %v451, 0.3275911
    %v464 = vmul.f32 %v452, 0.3275911
    %v465 = vmul.f32 %v453, 0.3275911
    %v466 = vmul.f32 %v454, 0.3275911
    %v467 = vmul.f32 %v455, 0.3275911
    %v468 = vmul.f32 %v456, 0.3275911
    %v469 = vmul.f32 %v457, 0.3275911
    %v470 = vmul.f32 %v458, 0.3275911
    %v471 = vadd.f32 %v459, 1.0
    %v472 = vadd.f32 %v460, 1.0
    %v473 = vadd.f32 %v461, 1.0
    %v474 = vadd.f32 %v462, 1.0
    %v475 = vadd.f32 %v463, 1.0
    %v476 = vadd.f32 %v464, 1.0
    %v477 = vadd.f32 %v465, 1.0
    %v478 = vadd.f32 %v466, 1.0
    %v479 = vadd.f32 %v467, 1.0
    %v480 = vadd.f32 %v468, 1.0
    %v481 = vadd.f32 %v469, 1.0
    %v482 = vadd.f32 %v470, 1.0
    %v483 = vrcp.pop %v471
    %v484 = vmul.f32 1.0, %v483
    %v485 = vrcp.pop %v472
    %v486 = vmul.f32 1.0, %v485
    %v487 = vrcp.pop %v473
    %v488 = vmul.f32 1.0, %v487
    %v489 = vrcp.pop %v474
    %v490 = vmul.f32 1.0, %v489
    %v491 = vrcp.pop %v475
    %v492 = vmul.f32 1.0, %v491
    %v493 = vrcp.pop %v476
    %v494 = vmul.f32 1.0, %v493
    %v495 = vrcp.pop %v477
    %v496 = vmul.f32 1.0, %v495
    %v497 = vrcp.pop %v478
    %v498 = vmul.f32 1.0, %v497
    %v499 = vrcp.pop %v479
    %v500 = vmul.f32 1.0, %v499
    %v501 = vrcp.pop %v480
    %v502 = vmul.f32 1.0, %v501
    %v503 = vrcp.pop %v481
    %v504 = vmul.f32 1.0, %v503
    %v505 = vrcp.pop %v482
    %v506 = vmul.f32 1.0, %v505
    %v507 = vmul.f32 %v484, 1.0614054
    %v508 = vmul.f32 %v486, 1.0614054
    %v509 = vmul.f32 %v488, 1.0614054
    %v510 = vmul.f32 %v490, 1.0614054
    %v511 = vmul.f32 %v492, 1.0614054
    %v512 = vmul.f32 %v494, 1.0614054
    %v513 = vmul.f32 %v496, 1.0614054
    %v514 = vmul.f32 %v498, 1.0614054
    %v515 = vmul.f32 %v500, 1.0614054
    %v516 = vmul.f32 %v502, 1.0614054
    %v517 = vmul.f32 %v504, 1.0614054
    %v518 = vmul.f32 %v506, 1.0614054
    %v519 = vadd.f32 %v507, -1.4531521
    %v520 = vadd.f32 %v508, -1.4531521
    %v521 = vadd.f32 %v509, -1.4531521
    %v522 = vadd.f32 %v510, -1.4531521
    %v523 = vadd.f32 %v511, -1.4531521
    %v524 = vadd.f32 %v512, -1.4531521
    %v525 = vadd.f32 %v513, -1.4531521
    %v526 = vadd.f32 %v514, -1.4531521
    %v527 = vadd.f32 %v515, -1.4531521
    %v528 = vadd.f32 %v516, -1.4531521
    %v529 = vadd.f32 %v517, -1.4531521
    %v530 = vadd.f32 %v518, -1.4531521
    %v531 = vmul.f32 %v519, %v484
    %v532 = vmul.f32 %v520, %v486
    %v533 = vmul.f32 %v521, %v488
    %v534 = vmul.f32 %v522, %v490
    %v535 = vmul.f32 %v523, %v492
    %v536 = vmul.f32 %v524, %v494
    %v537 = vmul.f32 %v525, %v496
    %v538 = vmul.f32 %v526, %v498
    %v539 = vmul.f32 %v527, %v500
    %v540 = vmul.f32 %v528, %v502
    %v541 = vmul.f32 %v529, %v504
    %v542 = vmul.f32 %v530, %v506
    %v543 = vadd.f32 %v531, 1.4214138
    %v544 = vadd.f32 %v532, 1.4214138
    %v545 = vadd.f32 %v533, 1.4214138
    %v546 = vadd.f32 %v534, 1.4214138
    %v547 = vadd.f32 %v535, 1.4214138
    %v548 = vadd.f32 %v536, 1.4214138
    %v549 = vadd.f32 %v537, 1.4214138
    %v550 = vadd.f32 %v538, 1.4214138
    %v551 = vadd.f32 %v539, 1.4214138
    %v552 = vadd.f32 %v540, 1.4214138
    %v553 = vadd.f32 %v541, 1.4214138
    %v554 = vadd.f32 %v542, 1.4214138
    %v555 = vmul.f32 %v543, %v484
    %v556 = vmul.f32 %v544, %v486
    %v557 = vmul.f32 %v545, %v488
    %v558 = vmul.f32 %v546, %v490
    %v559 = vmul.f32 %v547, %v492
    %v560 = vmul.f32 %v548, %v494
    %v561 = vmul.f32 %v549, %v496
    %v562 = vmul.f32 %v550, %v498
    %v563 = vmul.f32 %v551, %v500
    %v564 = vmul.f32 %v552, %v502
    %v565 = vmul.f32 %v553, %v504
    %v566 = vmul.f32 %v554, %v506
    %v567 = vadd.f32 %v555, -0.28449672
    %v568 = vadd.f32 %v556, -0.28449672
    %v569 = vadd.f32 %v557, -0.28449672
    %v570 = vadd.f32 %v558, -0.28449672
    %v571 = vadd.f32 %v559, -0.28449672
    %v572 = vadd.f32 %v560, -0.28449672
    %v573 = vadd.f32 %v561, -0.28449672
    %v574 = vadd.f32 %v562, -0.28449672
    %v575 = vadd.f32 %v563, -0.28449672
    %v576 = vadd.f32 %v564, -0.28449672
    %v577 = vadd.f32 %v565, -0.28449672
    %v578 = vadd.f32 %v566, -0.28449672
    %v579 = vmul.f32 %v567, %v484
    %v580 = vmul.f32 %v568, %v486
    %v581 = vmul.f32 %v569, %v488
    %v582 = vmul.f32 %v570, %v490
    %v583 = vmul.f32 %v571, %v492
    %v584 = vmul.f32 %v572, %v494
    %v585 = vmul.f32 %v573, %v496
    %v586 = vmul.f32 %v574, %v498
    %v587 = vmul.f32 %v575, %v500
    %v588 = vmul.f32 %v576, %v502
    %v589 = vmul.f32 %v577, %v504
    %v590 = vmul.f32 %v578, %v506
    %v591 = vadd.f32 %v579, 0.2548296
    %v592 = vadd.f32 %v580, 0.2548296
    %v593 = vadd.f32 %v581, 0.2548296
    %v594 = vadd.f32 %v582, 0.2548296
    %v595 = vadd.f32 %v583, 0.2548296
    %v596 = vadd.f32 %v584, 0.2548296
    %v597 = vadd.f32 %v585, 0.2548296
    %v598 = vadd.f32 %v586, 0.2548296
    %v599 = vadd.f32 %v587, 0.2548296
    %v600 = vadd.f32 %v588, 0.2548296
    %v601 = vadd.f32 %v589, 0.2548296
    %v602 = vadd.f32 %v590, 0.2548296
    %v603 = vmul.f32 %v591, %v484
    %v604 = vmul.f32 %v592, %v486
    %v605 = vmul.f32 %v593, %v488
    %v606 = vmul.f32 %v594, %v490
    %v607 = vmul.f32 %v595, %v492
    %v608 = vmul.f32 %v596, %v494
    %v609 = vmul.f32 %v597, %v496
    %v610 = vmul.f32 %v598, %v498
    %v611 = vmul.f32 %v599, %v500
    %v612 = vmul.f32 %v600, %v502
    %v613 = vmul.f32 %v601, %v504
    %v614 = vmul.f32 %v602, %v506
    %v615 = vsub.f32 0.0, %v447
    %v616 = vsub.f32 0.0, %v448
    %v617 = vsub.f32 0.0, %v449
    %v618 = vsub.f32 0.0, %v450
    %v619 = vsub.f32 0.0, %v451
    %v620 = vsub.f32 0.0, %v452
    %v621 = vsub.f32 0.0, %v453
    %v622 = vsub.f32 0.0, %v454
    %v623 = vsub.f32 0.0, %v455
    %v624 = vsub.f32 0.0, %v456
    %v625 = vsub.f32 0.0, %v457
    %v626 = vsub.f32 0.0, %v458
    %v627 = vmul.f32 %v615, %v447
    %v628 = vmul.f32 %v616, %v448
    %v629 = vmul.f32 %v617, %v449
    %v630 = vmul.f32 %v618, %v450
    %v631 = vmul.f32 %v619, %v451
    %v632 = vmul.f32 %v620, %v452
    %v633 = vmul.f32 %v621, %v453
    %v634 = vmul.f32 %v622, %v454
    %v635 = vmul.f32 %v623, %v455
    %v636 = vmul.f32 %v624, %v456
    %v637 = vmul.f32 %v625, %v457
    %v638 = vmul.f32 %v626, %v458
    %v639 = vmul.f32 %v627, 1.442695
    %v640 = vpow.pop %v639
    %v641 = vmul.f32 %v628, 1.442695
    %v642 = vpow.pop %v641
    %v643 = vmul.f32 %v629, 1.442695
    %v644 = vpow.pop %v643
    %v645 = vmul.f32 %v630, 1.442695
    %v646 = vpow.pop %v645
    %v647 = vmul.f32 %v631, 1.442695
    %v648 = vpow.pop %v647
    %v649 = vmul.f32 %v632, 1.442695
    %v650 = vpow.pop %v649
    %v651 = vmul.f32 %v633, 1.442695
    %v652 = vpow.pop %v651
    %v653 = vmul.f32 %v634, 1.442695
    %v654 = vpow.pop %v653
    %v655 = vmul.f32 %v635, 1.442695
    %v656 = vpow.pop %v655
    %v657 = vmul.f32 %v636, 1.442695
    %v658 = vpow.pop %v657
    %v659 = vmul.f32 %v637, 1.442695
    %v660 = vpow.pop %v659
    %v661 = vmul.f32 %v638, 1.442695
    %v662 = vpow.pop %v661
    %v663 = vmul.f32 %v603, %v640
    %v664 = vmul.f32 %v604, %v642
    %v665 = vmul.f32 %v605, %v644
    %v666 = vmul.f32 %v606, %v646
    %v667 = vmul.f32 %v607, %v648
    %v668 = vmul.f32 %v608, %v650
    %v669 = vmul.f32 %v609, %v652
    %v670 = vmul.f32 %v610, %v654
    %v671 = vmul.f32 %v611, %v656
    %v672 = vmul.f32 %v612, %v658
    %v673 = vmul.f32 %v613, %v660
    %v674 = vmul.f32 %v614, %v662
    %v675 = vsub.f32 1.0, %v663
    %v676 = vsub.f32 1.0, %v664
    %v677 = vsub.f32 1.0, %v665
    %v678 = vsub.f32 1.0, %v666
    %v679 = vsub.f32 1.0, %v667
    %v680 = vsub.f32 1.0, %v668
    %v681 = vsub.f32 1.0, %v669
    %v682 = vsub.f32 1.0, %v670
    %v683 = vsub.f32 1.0, %v671
    %v684 = vsub.f32 1.0, %v672
    %v685 = vsub.f32 1.0, %v673
    %v686 = vsub.f32 1.0, %v674
    %v687 = vmul.f32 %v435, %v675
    %v688 = vmul.f32 %v436, %v676
    %v689 = vmul.f32 %v437, %v677
    %v690 = vmul.f32 %v438, %v678
    %v691 = vmul.f32 %v439, %v679
    %v692 = vmul.f32 %v440, %v680
    %v693 = vmul.f32 %v441, %v681
    %v694 = vmul.f32 %v442, %v682
    %v695 = vmul.f32 %v443, %v683
    %v696 = vmul.f32 %v444, %v684
    %v697 = vmul.f32 %v445, %v685
    %v698 = vmul.f32 %v446, %v686
    %v699 = vadd.f32 %v687, 1.0
    %v700 = vadd.f32 %v688, 1.0
    %v701 = vadd.f32 %v689, 1.0
    %v702 = vadd.f32 %v690, 1.0
    %v703 = vadd.f32 %v691, 1.0
    %v704 = vadd.f32 %v692, 1.0
    %v705 = vadd.f32 %v693, 1.0
    %v706 = vadd.f32 %v694, 1.0
    %v707 = vadd.f32 %v695, 1.0
    %v708 = vadd.f32 %v696, 1.0
    %v709 = vadd.f32 %v697, 1.0
    %v710 = vadd.f32 %v698, 1.0
    %v711 = vmul.f32 %v399, %v699
    %v712 = vmul.f32 %v400, %v700
    %v713 = vmul.f32 %v401, %v701
    %v714 = vmul.f32 %v402, %v702
    %v715 = vmul.f32 %v403, %v703
    %v716 = vmul.f32 %v404, %v704
    %v717 = vmul.f32 %v405, %v705
    %v718 = vmul.f32 %v406, %v706
    %v719 = vmul.f32 %v407, %v707
    %v720 = vmul.f32 %v408, %v708
    %v721 = vmul.f32 %v409, %v709
    %v722 = vmul.f32 %v410, %v710
    %v723 = vpack.c.bf16 %v715, %v711
    %v724 = vpack.c.bf16 %v716, %v712
    %v725 = vpack.c.bf16 %v717, %v713
    %v726 = vpack.c.bf16 %v718, %v714
    %v727 = vpack.c.bf16 %v719, %v719
    %v728 = vpack.c.bf16 %v720, %v720
    %v729 = vpack.c.bf16 %v721, %v721
    %v730 = vpack.c.bf16 %v722, %v722
    %735 = vrot.lane.b32.xlu0 %v723, 3
    %v736 = vpop.permute.xlu0 %735
    %737 = vrot.lane.b32.xlu0 %v724, 3
    %v738 = vpop.permute.xlu0 %737
    %739 = vrot.lane.b32.xlu0 %v727, 3
    %v740 = vpop.permute.xlu0 %739
    %741 = vrot.lane.b32.xlu0 %v728, 3
    %v742 = vpop.permute.xlu0 %741
    %v743 = vsel %vm86, %v736, %v738
    %v744 = vsel %vm86, %v740, %v742
    %v747 = vsel %vm89, 0, %v736
    %v750 = vsel %vm89, 0, %v740
    %v752 = vsel %vm89, %v738, 0
    %v754 = vsel %vm89, %v742, 0
    %vm759 = vcmask 1043456
    %v760 = vrot.slane %v747, 4
    %v761 = vrot.slane %v743, 4
    %v762 = vrot.slane %v752, 4
    %v763 = vrot.slane %v750, 4
    %v764 = vsel %vm759, %v760, %v763
    %v765 = vrot.slane %v744, 4
    %v766 = vsel %vm759, %v761, %v765
    %v767 = vrot.slane %v754, 4
    %v768 = vsel %vm759, %v762, %v767
    %769 = vrot.lane.b32.xlu0 %v760, 127
    %v770 = vpop.permute.xlu0 %769
    %771 = vrot.lane.b32.xlu0 %v761, 127
    %v772 = vpop.permute.xlu0 %771
    %773 = vrot.lane.b32.xlu0 %v762, 127
    %v774 = vpop.permute.xlu0 %773
    %775 = vrot.lane.b32.xlu0 %v764, 127
    %v776 = vpop.permute.xlu0 %775
    %777 = vrot.lane.b32.xlu0 %v766, 127
    %v778 = vpop.permute.xlu0 %777
    %779 = vrot.lane.b32.xlu0 %v768, 127
    %v780 = vpop.permute.xlu0 %779
    %v781 = vsel %vm103, %v770, %v772
    %v782 = vsel %vm103, %v772, %v774
    %v783 = vsel %vm103, %v776, %v778
    %v784 = vsel %vm103, %v778, %v780
    %787 = vrot.lane.b32.xlu0 %v747, 126
    %v788 = vpop.permute.xlu0 %787
    %789 = vrot.lane.b32.xlu0 %v743, 126
    %v790 = vpop.permute.xlu0 %789
    %791 = vrot.lane.b32.xlu0 %v752, 126
    %v792 = vpop.permute.xlu0 %791
    %793 = vrot.lane.b32.xlu0 %v750, 126
    %v794 = vpop.permute.xlu0 %793
    %795 = vrot.lane.b32.xlu0 %v744, 126
    %v796 = vpop.permute.xlu0 %795
    %797 = vrot.lane.b32.xlu0 %v754, 126
    %v798 = vpop.permute.xlu0 %797
    %v799 = vsel %vm114, %v788, %v790
    %v800 = vsel %vm114, %v790, %v792
    %v801 = vsel %vm114, %v794, %v796
    %v802 = vsel %vm114, %v796, %v798
    %805 = vrot.lane.b32.xlu0 %v760, 125
    %v806 = vpop.permute.xlu0 %805
    %807 = vrot.lane.b32.xlu0 %v761, 125
    %v808 = vpop.permute.xlu0 %807
    %809 = vrot.lane.b32.xlu0 %v762, 125
    %v810 = vpop.permute.xlu0 %809
    %811 = vrot.lane.b32.xlu0 %v764, 125
    %v812 = vpop.permute.xlu0 %811
    %813 = vrot.lane.b32.xlu0 %v766, 125
    %v814 = vpop.permute.xlu0 %813
    %815 = vrot.lane.b32.xlu0 %v768, 125
    %v816 = vpop.permute.xlu0 %815
    %v817 = vsel %vm125, %v806, %v808
    %v818 = vsel %vm125, %v808, %v810
    %v819 = vsel %vm125, %v812, %v814
    %v820 = vsel %vm125, %v814, %v816
    %823 = vrot.lane.b32.xlu0 %v747, 124
    %v824 = vpop.permute.xlu0 %823
    %825 = vrot.lane.b32.xlu0 %v743, 124
    %v826 = vpop.permute.xlu0 %825
    %827 = vrot.lane.b32.xlu0 %v752, 124
    %v828 = vpop.permute.xlu0 %827
    %829 = vrot.lane.b32.xlu0 %v750, 124
    %v830 = vpop.permute.xlu0 %829
    %831 = vrot.lane.b32.xlu0 %v744, 124
    %v832 = vpop.permute.xlu0 %831
    %833 = vrot.lane.b32.xlu0 %v754, 124
    %v834 = vpop.permute.xlu0 %833
    %v835 = vsel %vm136, %v824, %v826
    %v836 = vsel %vm136, %v826, %v828
    %v837 = vsel %vm136, %v830, %v832
    %v838 = vsel %vm136, %v832, %v834
    %841 = vrot.lane.b32.xlu0 %v760, 123
    %v842 = vpop.permute.xlu0 %841
    %843 = vrot.lane.b32.xlu0 %v761, 123
    %v844 = vpop.permute.xlu0 %843
    %845 = vrot.lane.b32.xlu0 %v762, 123
    %v846 = vpop.permute.xlu0 %845
    %847 = vrot.lane.b32.xlu0 %v764, 123
    %v848 = vpop.permute.xlu0 %847
    %849 = vrot.lane.b32.xlu0 %v766, 123
    %v850 = vpop.permute.xlu0 %849
    %851 = vrot.lane.b32.xlu0 %v768, 123
    %v852 = vpop.permute.xlu0 %851
    %v853 = vsel %vm147, %v842, %v844
    %v854 = vsel %vm147, %v844, %v846
    %v855 = vsel %vm147, %v848, %v850
    %v856 = vsel %vm147, %v850, %v852
    %859 = vrot.lane.b32.xlu0 %v747, 122
    %v860 = vpop.permute.xlu0 %859
    %861 = vrot.lane.b32.xlu0 %v743, 122
    %v862 = vpop.permute.xlu0 %861
    %863 = vrot.lane.b32.xlu0 %v752, 122
    %v864 = vpop.permute.xlu0 %863
    %865 = vrot.lane.b32.xlu0 %v750, 122
    %v866 = vpop.permute.xlu0 %865
    %867 = vrot.lane.b32.xlu0 %v744, 122
    %v868 = vpop.permute.xlu0 %867
    %869 = vrot.lane.b32.xlu0 %v754, 122
    %v870 = vpop.permute.xlu0 %869
    %v871 = vsel %vm158, %v860, %v862
    %v872 = vsel %vm158, %v862, %v864
    %v873 = vsel %vm158, %v866, %v868
    %v874 = vsel %vm158, %v868, %v870
    %v878 = vsel %vm69, %v750, %v781
    %v882 = vsel %vm69, %v744, %v782
    %v886 = vsel %vm69, %v801, %v817
    %v890 = vsel %vm69, %v802, %v818
    %v894 = vsel %vm69, %v837, %v853
    %v898 = vsel %vm69, %v838, %v854
    %904 = vrot.lane.b32.xlu0 %v725, 3
    %v905 = vpop.permute.xlu0 %904
    %906 = vrot.lane.b32.xlu0 %v726, 3
    %v907 = vpop.permute.xlu0 %906
    %908 = vrot.lane.b32.xlu0 %v729, 3
    %v909 = vpop.permute.xlu0 %908
    %910 = vrot.lane.b32.xlu0 %v730, 3
    %v911 = vpop.permute.xlu0 %910
    %v912 = vsel %vm86, %v905, %v907
    %v913 = vsel %vm86, %v909, %v911
    %v916 = vsel %vm89, 0, %v905
    %v919 = vsel %vm89, 0, %v909
    %v921 = vsel %vm89, %v907, 0
    %v923 = vsel %vm89, %v911, 0
    %v928 = vrot.slane %v916, 4
    %v929 = vrot.slane %v912, 4
    %v930 = vrot.slane %v921, 4
    %v931 = vrot.slane %v919, 4
    %v932 = vsel %vm759, %v928, %v931
    %v933 = vrot.slane %v913, 4
    %v934 = vsel %vm759, %v929, %v933
    %v935 = vrot.slane %v923, 4
    %v936 = vsel %vm759, %v930, %v935
    %937 = vrot.lane.b32.xlu0 %v928, 127
    %v938 = vpop.permute.xlu0 %937
    %939 = vrot.lane.b32.xlu0 %v929, 127
    %v940 = vpop.permute.xlu0 %939
    %941 = vrot.lane.b32.xlu0 %v930, 127
    %v942 = vpop.permute.xlu0 %941
    %943 = vrot.lane.b32.xlu0 %v932, 127
    %v944 = vpop.permute.xlu0 %943
    %945 = vrot.lane.b32.xlu0 %v934, 127
    %v946 = vpop.permute.xlu0 %945
    %947 = vrot.lane.b32.xlu0 %v936, 127
    %v948 = vpop.permute.xlu0 %947
    %v949 = vsel %vm103, %v938, %v940
    %v950 = vsel %vm103, %v940, %v942
    %v951 = vsel %vm103, %v944, %v946
    %v952 = vsel %vm103, %v946, %v948
    %955 = vrot.lane.b32.xlu0 %v916, 126
    %v956 = vpop.permute.xlu0 %955
    %957 = vrot.lane.b32.xlu0 %v912, 126
    %v958 = vpop.permute.xlu0 %957
    %959 = vrot.lane.b32.xlu0 %v921, 126
    %v960 = vpop.permute.xlu0 %959
    %961 = vrot.lane.b32.xlu0 %v919, 126
    %v962 = vpop.permute.xlu0 %961
    %963 = vrot.lane.b32.xlu0 %v913, 126
    %v964 = vpop.permute.xlu0 %963
    %965 = vrot.lane.b32.xlu0 %v923, 126
    %v966 = vpop.permute.xlu0 %965
    %v967 = vsel %vm114, %v956, %v958
    %v968 = vsel %vm114, %v958, %v960
    %v969 = vsel %vm114, %v962, %v964
    %v970 = vsel %vm114, %v964, %v966
    %973 = vrot.lane.b32.xlu0 %v928, 125
    %v974 = vpop.permute.xlu0 %973
    %975 = vrot.lane.b32.xlu0 %v929, 125
    %v976 = vpop.permute.xlu0 %975
    %977 = vrot.lane.b32.xlu0 %v930, 125
    %v978 = vpop.permute.xlu0 %977
    %979 = vrot.lane.b32.xlu0 %v932, 125
    %v980 = vpop.permute.xlu0 %979
    %981 = vrot.lane.b32.xlu0 %v934, 125
    %v982 = vpop.permute.xlu0 %981
    %983 = vrot.lane.b32.xlu0 %v936, 125
    %v984 = vpop.permute.xlu0 %983
    %v985 = vsel %vm125, %v974, %v976
    %v986 = vsel %vm125, %v976, %v978
    %v987 = vsel %vm125, %v980, %v982
    %v988 = vsel %vm125, %v982, %v984
    %991 = vrot.lane.b32.xlu0 %v916, 124
    %v992 = vpop.permute.xlu0 %991
    %993 = vrot.lane.b32.xlu0 %v912, 124
    %v994 = vpop.permute.xlu0 %993
    %995 = vrot.lane.b32.xlu0 %v921, 124
    %v996 = vpop.permute.xlu0 %995
    %997 = vrot.lane.b32.xlu0 %v919, 124
    %v998 = vpop.permute.xlu0 %997
    %999 = vrot.lane.b32.xlu0 %v913, 124
    %v1000 = vpop.permute.xlu0 %999
    %1001 = vrot.lane.b32.xlu0 %v923, 124
    %v1002 = vpop.permute.xlu0 %1001
    %v1003 = vsel %vm136, %v992, %v994
    %v1004 = vsel %vm136, %v994, %v996
    %v1005 = vsel %vm136, %v998, %v1000
    %v1006 = vsel %vm136, %v1000, %v1002
    %1009 = vrot.lane.b32.xlu0 %v928, 123
    %v1010 = vpop.permute.xlu0 %1009
    %1011 = vrot.lane.b32.xlu0 %v929, 123
    %v1012 = vpop.permute.xlu0 %1011
    %1013 = vrot.lane.b32.xlu0 %v930, 123
    %v1014 = vpop.permute.xlu0 %1013
    %1015 = vrot.lane.b32.xlu0 %v932, 123
    %v1016 = vpop.permute.xlu0 %1015
    %1017 = vrot.lane.b32.xlu0 %v934, 123
    %v1018 = vpop.permute.xlu0 %1017
    %1019 = vrot.lane.b32.xlu0 %v936, 123
    %v1020 = vpop.permute.xlu0 %1019
    %v1021 = vsel %vm147, %v1010, %v1012
    %v1022 = vsel %vm147, %v1012, %v1014
    %v1023 = vsel %vm147, %v1016, %v1018
    %v1024 = vsel %vm147, %v1018, %v1020
    %1027 = vrot.lane.b32.xlu0 %v916, 122
    %v1028 = vpop.permute.xlu0 %1027
    %1029 = vrot.lane.b32.xlu0 %v912, 122
    %v1030 = vpop.permute.xlu0 %1029
    %1031 = vrot.lane.b32.xlu0 %v921, 122
    %v1032 = vpop.permute.xlu0 %1031
    %1033 = vrot.lane.b32.xlu0 %v919, 122
    %v1034 = vpop.permute.xlu0 %1033
    %1035 = vrot.lane.b32.xlu0 %v913, 122
    %v1036 = vpop.permute.xlu0 %1035
    %1037 = vrot.lane.b32.xlu0 %v923, 122
    %v1038 = vpop.permute.xlu0 %1037
    %v1039 = vsel %vm158, %v1028, %v1030
    %v1040 = vsel %vm158, %v1030, %v1032
    %v1041 = vsel %vm158, %v1034, %v1036
    %v1042 = vsel %vm158, %v1036, %v1038
    %v1046 = vsel %vm69, %v919, %v949
    %v1050 = vsel %vm69, %v913, %v950
    %v1054 = vsel %vm69, %v969, %v985
    %v1058 = vsel %vm69, %v970, %v986
    %v1062 = vsel %vm69, %v1005, %v1021
    %v1066 = vsel %vm69, %v1006, %v1022
    %v1068 = vld [vmem:[#allocation5] sm:$0xff]
    %v1069 = vld [vmem:[%s6] sm:$0xff]
    %1071 = vset.pattern.permute.xlu0 0
    %1072 = vperm.xlu0 %1071, %v1069
    %v1073 = vpop.permute.xlu0 %1072
    %v1076 = vunpack.c.l.b16 %v1068
    %v1077 = vunpack.c.h.b16 %v1068
    %v1078 = vpack.c.b16 %v1076, %v1076
    %v1079 = vpack.c.b16 %v1077, %v1077
    %vm1081 = vcmask 326656
    %v1083 = vsel %vm1081, %v1079, 0
    %v1086 = vsel %vm69, %v873, 0
    %v1089 = vsel %vm69, %v874, 0
    %v1092 = vsel %vm69, %v1041, 0
    %v1095 = vsel %vm69, %v1042, 0
    %1097 = vmatprep.subr.bf16.mxu0 %v743
    %1098 = vmatpush1.bf16.msra.mxu0 %v747
    %1099 = vmatprep.subr.bf16.mxu0 %v882
    %1100 = vmatpush1.bf16.msra.mxu0 %v878
    %1101 = vmatprep.subr.bf16.mxu0 %v784
    %1102 = vmatpush1.bf16.msra.mxu0 %v783
    %1103 = vmatprep.subr.bf16.mxu0 %v800
    %1104 = vmatpush1.bf16.msra.mxu0 %v799
    %1105 = vmatprep.subr.bf16.mxu0 %v890
    %1106 = vmatpush1.bf16.msra.mxu0 %v886
    %1107 = vmatprep.subr.bf16.mxu0 %v820
    %1108 = vmatpush1.bf16.msra.mxu0 %v819
    %1109 = vmatprep.subr.bf16.mxu0 %v836
    %1110 = vmatpush1.bf16.msra.mxu0 %v835
    %1111 = vmatprep.subr.bf16.mxu0 %v898
    %1112 = vmatpush1.bf16.msra.mxu0 %v894
    %1113 = vmatprep.subr.bf16.mxu0 %v856
    %1114 = vmatpush1.bf16.msra.mxu0 %v855
    %1115 = vmatprep.subr.bf16.mxu0 %v872
    %1116 = vmatpush1.bf16.msra.mxu0 %v871
    %1117 = vmatprep.subr.bf16.mxu0 %v1089
    %1118 = vmatpush1.bf16.msra.mxu0 %v1086
    %1119 = vmatprep.subr.bf16.mxu0 0
    %1120 = vmatpush1.bf16.msra.mxu0 0
    %1121 = vmatprep.subr.bf16.mxu0 0
    %1122 = vmatpush1.bf16.msra.mxu0 0
    %1123 = vmatprep.subr.bf16.mxu0 0
    %1124 = vmatpush1.bf16.msra.mxu0 0
    %1125 = vmatprep.subr.bf16.mxu0 0
    %1126 = vmatpush1.bf16.msra.mxu0 0
    %1127 = vmatprep.subr.bf16.mxu0 0
    %1128 = vmatpush1.bf16.msra.mxu0 0
    %1129 = vmatprep.mubr.bf16.mxu0 %v1083
    %1130 = vmatmul.mubr.bf16.gmra.mrb[0].mxu0 %v1078
    %v1131 = vpop.f32.mrb[0].mxu0
    %v1132 = vadd.f32 %v1073, %v1131
    %v1133 = vpop.f32.mrb[0].mxu0
    %v1134 = vadd.f32 %v1073, %v1133
    %v1135 = vpop.f32.mrb[0].mxu0
    %v1136 = vpop.f32.mrb[0].mxu0
    %1137 = vdwg.mxu0
    %1138 = vmatprep.subr.bf16.mxu0 %v912
    %1139 = vmatpush1.bf16.msra.mxu0 %v916
    %1140 = vmatprep.subr.bf16.mxu0 %v1050
    %1141 = vmatpush1.bf16.msra.mxu0 %v1046
    %1142 = vmatprep.subr.bf16.mxu0 %v952
    %1143 = vmatpush1.bf16.msra.mxu0 %v951
    %1144 = vmatprep.subr.bf16.mxu0 %v968
    %1145 = vmatpush1.bf16.msra.mxu0 %v967
    %1146 = vmatprep.subr.bf16.mxu0 %v1058
    %1147 = vmatpush1.bf16.msra.mxu0 %v1054
    %1148 = vmatprep.subr.bf16.mxu0 %v988
    %1149 = vmatpush1.bf16.msra.mxu0 %v987
    %1150 = vmatprep.subr.bf16.mxu0 %v1004
    %1151 = vmatpush1.bf16.msra.mxu0 %v1003
    %1152 = vmatprep.subr.bf16.mxu0 %v1066
    %1153 = vmatpush1.bf16.msra.mxu0 %v1062
    %1154 = vmatprep.subr.bf16.mxu0 %v1024
    %1155 = vmatpush1.bf16.msra.mxu0 %v1023
    %1156 = vmatprep.subr.bf16.mxu0 %v1040
    %1157 = vmatpush1.bf16.msra.mxu0 %v1039
    %1158 = vmatprep.subr.bf16.mxu0 %v1095
    %1159 = vmatpush1.bf16.msra.mxu0 %v1092
    %1160 = vmatprep.subr.bf16.mxu0 0
    %1161 = vmatpush1.bf16.msra.mxu0 0
    %1162 = vmatprep.subr.bf16.mxu0 0
    %1163 = vmatpush1.bf16.msra.mxu0 0
    %1164 = vmatprep.subr.bf16.mxu0 0
    %1165 = vmatpush1.bf16.msra.mxu0 0
    %1166 = vmatprep.subr.bf16.mxu0 0
    %1167 = vmatpush1.bf16.msra.mxu0 0
    %1168 = vmatprep.subr.bf16.mxu0 0
    %1169 = vmatpush1.bf16.msra.mxu0 0
    %1170 = vmatprep.mubr.bf16.mxu0 %v1083
    %1171 = vmatmul.mubr.bf16.gmra.mrb[0].mxu0 %v1078
    %v1172 = vpop.f32.mrb[0].mxu0
    %v1173 = vadd.f32 %v1073, %v1172
    %v1174 = vpop.f32.mrb[0].mxu0
    %v1175 = vadd.f32 %v1073, %v1174
    %v1176 = vpop.f32.mrb[0].mxu0
    %v1177 = vpop.f32.mrb[0].mxu0
    %1178 = vdwg.mxu0
    %v1181 = vcombine.low %v1132, %v1134
    %1183 = vst [vmem:[#allocation7] sm:$0xff] %v1181
    %v1184 = vcombine.high %v1132, %v1134
    %1186 = vst [vmem:[#allocation8] sm:$0xff] %v1184
    %v1189 = vcombine.low %v1173, %v1175
    %s1191 = scalar_lea.vmem [#allocation7], 8
    %1192 = vst [vmem:[%s1191] sm:$0xff] %v1189
    %v1193 = vcombine.high %v1173, %v1175
    %s1195 = scalar_lea.vmem [#allocation8], 8
    %1196 = vst [vmem:[%s1195] sm:$0xff] %v1193
    // Predicated region
    $region38: #{mol_translator_apply.1} parent=1 // pred_check
      _
    $region39: #{mol_translator_apply.1} parent=1 // pred_check_branch
      %1198 = sbr.rel (0) target = $region41
    $region40: #{mol_translator_apply.1} parent=1 // pred_region
      %s1200 = ssub.s32 256, 256
      %1201 = vsyncadd [#allocation4], %s1200
      %s1202 = sshll.u32 [#allocation7], 4
      %s1203 = int_to_ptr.vmem [resolvable:$true] %s1202
      %1208 = dma.vmem_to_hbm [thread:$0]  %s1203, 256, %s7, [#allocation4], 128, 128, 8
    $region41: #{mol_translator_apply.1} parent=1 // pred_fallthru
      _
    // Predicated region
    $region42: #{mol_translator_apply.1} parent=1 // pred_check
      _
    $region43: #{mol_translator_apply.1} parent=1 // pred_check_branch
      %1210 = sbr.rel (0) target = $region45
    $region44: #{mol_translator_apply.1} parent=1 // pred_region
      %s1212 = ssub.s32 256, 256
      %1213 = vsyncadd [#allocation9], %s1212
      %s1214 = sshll.u32 [#allocation8], 4
      %s1215 = int_to_ptr.vmem [resolvable:$true] %s1214
      %1220 = dma.vmem_to_hbm [thread:$0]  %s1215, 256, %s8, [#allocation9], 128, 128, 8
    $region45: #{mol_translator_apply.1} parent=1 // pred_fallthru
      _
    // Predicated region
    $region46: #{mol_translator_apply.1} parent=1 // pred_check
      _
    $region47: #{mol_translator_apply.1} parent=1 // pred_check_branch
      %1222 = sbr.rel (0) target = $region49
    $region48: #{mol_translator_apply.1} parent=1 // pred_region
      %1223 = dma.done [#allocation4], 256
    $region49: #{mol_translator_apply.1} parent=1 // pred_fallthru
      _
    // Predicated region
    $region50: #{mol_translator_apply.1} parent=1 // pred_check
      _
    $region51: #{mol_translator_apply.1} parent=1 // pred_check_branch
      %1225 = sbr.rel (0) target = $region53
    $region52: #{mol_translator_apply.1} parent=1 // pred_region
      %1226 = dma.done [#allocation9], 256
    $region53: #{mol_translator_apply.1} parent=1 // pred_fallthru
      _
    %1227 = vsyncpa [#allocation3], 1
    %1228 = vsyncpa [#allocation6], 1
    %1229 = vsyncpa [#allocation4], 1
    %1230 = vsyncpa [#allocation9], 1

</llo_original>
